<compile_context>
chip_gen: v6e
topology: v6e:2x2x1
jax: 0.10.0
libtpu: 0.0.40
codegen_flags: <defaults>
</compile_context>

<pallas_src>
import math

import jax
import jax.numpy as jnp
from jax.experimental import pallas as pl
from jax.experimental.pallas import tpu as pltpu


# ---------------------------------------------------------------------------
# In-kernel math helpers
# ---------------------------------------------------------------------------
def _erf(x):
    # erf via Abramowitz & Stegun 7.1.26 rational approximation
    # (max abs error ~1.5e-7 ~= f32 ulp), built from VPU/EUP-friendly ops.
    p = 0.3275911
    a1, a2, a3, a4, a5 = (0.254829592, -0.284496736, 1.421413741,
                          -1.453152027, 1.061405429)
    ax = jnp.abs(x)
    t = 1.0 / (1.0 + p * ax)
    poly = ((((a5 * t + a4) * t + a3) * t + a2) * t + a1) * t
    y = 1.0 - poly * jnp.exp(-ax * ax)
    return jnp.where(x >= 0.0, y, -y)


def _gelu_exact(x):
    # matches torch.nn.GELU() default (erf-based, not tanh approximation)
    return 0.5 * x * (1.0 + _erf(x * (1.0 / math.sqrt(2.0))))


def _block_diag(w, r):
    """(din, dout) -> (r*din, r*dout) with w repeated on the diagonal."""
    return jnp.kron(jnp.eye(r, dtype=w.dtype), w)


# ---------------------------------------------------------------------------
# One-time parameter packing (hoisted out of the per-call path — cache/reuse)
# ---------------------------------------------------------------------------
def pack_params(params, *, num_slots, num_objects, dtype=jnp.float32):
    """Pack the per-slot / per-object Linear weights into lane-dense
    block-diagonal slabs.  Call once at model-load time; the per-step encode()
    then does no packing work at all."""
    S, Nobj = num_slots, num_objects
    obj_ws, obj_bs = params["obj_ws"], params["obj_bs"]

    w_slot = _block_diag(params["slot_proj_w"].astype(dtype), S)       # (S*Dslot, S*E)
    b_slot = jnp.tile(params["slot_proj_b"].astype(dtype), S)[None, :]  # (1, S*E)
    mean = jnp.tile(params["obj_mean"].astype(dtype), Nobj)[None, :]    # (1, Nobj*Dobj)
    inv_std = jnp.tile(1.0 / params["obj_std"].astype(dtype), Nobj)[None, :]
    obj_wb = []
    for w, b in zip(obj_ws, obj_bs):
        obj_wb.append(_block_diag(w.astype(dtype), Nobj))               # (Nobj*din, Nobj*E)
        obj_wb.append(jnp.tile(b.astype(dtype), Nobj)[None, :])         # (1, Nobj*E)

    packed = {
        "w_slot": w_slot, "b_slot": b_slot, "mean": mean, "inv_std": inv_std,
        "obj_wb": tuple(obj_wb),
        "S": S, "Nobj": Nobj,
        "Dslot": int(params["slot_proj_w"].shape[0]),
        "Dobj": int(obj_ws[0].shape[0]),
        "E": int(params["slot_proj_w"].shape[1]),
        "num_gelu": len(obj_ws) - 1,
        "obj_layer_dims": tuple(int(w.shape[0]) for w in obj_ws),
    }
    # Materialize now so the packing cost never lands on the per-step path.
    return jax.tree_util.tree_map(
        lambda a: jax.block_until_ready(a) if isinstance(a, jax.Array) else a,
        packed)


# ---------------------------------------------------------------------------
# Row-tiling policy
# ---------------------------------------------------------------------------
def _row_tiling(M, max_tm=1024, prefer_min_steps=2):
    """Balanced row tiles: tile height is a sublane multiple, the last tile is
    never mostly padding, and (when M is large enough) there are at least
    `prefer_min_steps` grid steps so v7x megacore can split the row axis."""
    steps = max(1, -(-M // max_tm))
    if steps < prefer_min_steps and M >= prefer_min_steps * 256:
        steps = prefer_min_steps
    if steps == 1:
        return M, 1          # full-extent block (also covers M not multiple of 8)
    tm = -(-M // steps)
    tm = ((tm + 7) // 8) * 8
    return tm, -(-M // tm)


# ---------------------------------------------------------------------------
# Fused kernel: slot_projection  +  (normalize -> (Linear,GELU)*k -> Linear),
# writing directly into the concatenated output slab.
# ---------------------------------------------------------------------------
def _make_fused_kernel(num_gelu_layers, slot_cols):
    def kernel(*refs):
        slots_ref, x_ref, wslot_ref, bslot_ref, mean_ref, istd_ref = refs[:6]
        out_ref = refs[-1]
        obj_wb = refs[6:-1]

        # slot_projection: per-slot Linear packed as a block-diagonal matmul
        s = jnp.dot(slots_ref[...], wslot_ref[...],
                    preferred_element_type=jnp.float32) + bslot_ref[...]

        # normalize (multiply by precomputed 1/std) + object_projection MLP
        h = (x_ref[...] - mean_ref[...]) * istd_ref[...]
        n_layers = len(obj_wb) // 2
        for i in range(n_layers):
            h = jnp.dot(h, obj_wb[2 * i][...],
                        preferred_element_type=jnp.float32) + obj_wb[2 * i + 1][...]
            if i < num_gelu_layers:
                h = _gelu_exact(h)

        # Both column slices are 128-lane aligned -> unmasked full-width stores.
        out_ref[:, :slot_cols] = s.astype(out_ref.dtype)
        out_ref[:, slot_cols:] = h.astype(out_ref.dtype)
    return kernel


# ---------------------------------------------------------------------------
# ObjectLevelSlotsEncoder.encode  (slots_embeds path) — takes packed params
# ---------------------------------------------------------------------------
def encode(packed, x, object_level_ids, slots_embeds, return_targets=False,
           *, max_tm=1024, prefer_min_steps=2, out_dtype=jnp.float32):
    encoded_slots = slots_embeds                        # (B, Ts, S, Dslot)
    T = x.shape[1]
    if encoded_slots.shape[1] > T:
        target_slots = encoded_slots[:, -T:, :, :]
        encoded_slots = encoded_slots[:, :T, :, :]
    else:
        target_slots = encoded_slots

    B, Te, S, Dslot = encoded_slots.shape
    Bx, Tx, Nobj, Dobj = x.shape
    if (B, Te) != (Bx, Tx):
        raise ValueError("slot / object batch-time dims must match for concat")
    if (S, Dslot, Nobj, Dobj) != (packed["S"], packed["Dslot"],
                                  packed["Nobj"], packed["Dobj"]):
        raise ValueError("input shapes do not match the packed parameters")
    E = packed["E"]
    num_gelu = packed["num_gelu"]
    obj_wb = packed["obj_wb"]

    # ---- lane-dense 2-D views (pure layout plumbing, no compute) ------------
    M = B * Te
    slots2d = encoded_slots.reshape(M, S * Dslot)
    x2d = x.reshape(M, Nobj * Dobj)

    slot_cols = S * E
    obj_cols = Nobj * E
    out_cols = slot_cols + obj_cols

    tm, steps = _row_tiling(M, max_tm=max_tm, prefer_min_steps=prefer_min_steps)
    grid = (steps,)

    # Advisory cost: *useful* FLOPs (per-slot / per-object 32-wide matmuls), not
    # the zero-padded block-diagonal count, plus actual bytes moved.
    flops = 2 * M * S * Dslot * E
    for din in packed["obj_layer_dims"]:
        flops += 2 * M * Nobj * din * E
    transcendentals = 2 * M * Nobj * E * num_gelu        # exp + rcp per GELU elem
    const_bytes = sum(int(a.size) * a.dtype.itemsize
                      for a in (packed["w_slot"], packed["b_slot"],
                                packed["mean"], packed["inv_std"], *obj_wb))
    bytes_accessed = (4 * M * (S * Dslot + Nobj * Dobj)
                      + jnp.dtype(out_dtype).itemsize * M * out_cols + const_bytes)
    cost = pl.CostEstimate(flops=int(flops),
                           transcendentals=int(transcendentals),
                           bytes_accessed=int(bytes_accessed))

    def run(single_buffer_consts):
        def const_spec(shape):
            idx_map = lambda i: (0, 0)
            if single_buffer_consts:
                # Block index never changes across the grid -> one VMEM buffer.
                return pl.BlockSpec(shape, idx_map, pipeline_mode=pl.Buffered(1))
            return pl.BlockSpec(shape, idx_map)

        in_specs = [
            pl.BlockSpec((tm, S * Dslot), lambda i: (i, 0)),
            pl.BlockSpec((tm, Nobj * Dobj), lambda i: (i, 0)),
            const_spec(packed["w_slot"].shape),
            const_spec(packed["b_slot"].shape),
            const_spec(packed["mean"].shape),
            const_spec(packed["inv_std"].shape),
        ]
        for a in obj_wb:
            in_specs.append(const_spec(a.shape))

        return pl.pallas_call(
            _make_fused_kernel(num_gelu, slot_cols),
            grid=grid,
            out_shape=jax.ShapeDtypeStruct((M, out_cols), out_dtype),
            in_specs=in_specs,
            out_specs=pl.BlockSpec((tm, out_cols), lambda i: (i, 0)),
            compiler_params=pltpu.CompilerParams(
                dimension_semantics=("parallel",)),
            cost_estimate=cost,
        )(slots2d, x2d, packed["w_slot"], packed["b_slot"],
          packed["mean"], packed["inv_std"], *obj_wb)

    try:
        out2d = run(single_buffer_consts=True)
    except Exception:
        # Fallback for jax versions where pipeline_mode on a top-level
        # pallas_call BlockSpec is unsupported; identical numerics.
        out2d = run(single_buffer_consts=False)

    # (M, (S+Nobj)*E) is exactly the concatenated (slots, objects) slab.
    out = out2d.reshape(B, Te, S + Nobj, E)

    slot_object_level_ids = jnp.ones((B, Te, S), dtype=object_level_ids.dtype)
    out_object_level_ids = jnp.concatenate(
        [slot_object_level_ids, object_level_ids], axis=-1)

    if return_targets:
        return out, out_object_level_ids, target_slots
    return out, out_object_level_ids


# ---------------------------------------------------------------------------
# Pure-JAX reference (mirrors the PyTorch forward exactly)
# ---------------------------------------------------------------------------
def encode_reference(params, x, object_level_ids, slots_embeds):
    es = slots_embeds
    T = x.shape[1]
    if es.shape[1] > T:
        target = es[:, -T:, :, :]
        es = es[:, :T, :, :]
    else:
        target = es
    es_p = es @ params["slot_proj_w"] + params["slot_proj_b"]
    h = (x - params["obj_mean"]) / params["obj_std"]
    ws, bs = params["obj_ws"], params["obj_bs"]
    for i in range(len(ws) - 1):
        h = jax.nn.gelu(h @ ws[i] + bs[i], approximate=False)
    h = h @ ws[-1] + bs[-1]
    out = jnp.concatenate([es_p, h], axis=-2)
    slot_ids = jnp.ones(es_p.shape[:-1], dtype=object_level_ids.dtype)
    out_ids = jnp.concatenate([slot_ids, object_level_ids], axis=-1)
    return out, out_ids, target


# ---------------------------------------------------------------------------
if __name__ == "__main__":
    # Small config consistent with the module:
    #   slot_size = 32, n_embd = 32, object_dims = 32,
    #   num_slots = 4, object_level_max_route_length = 8 (width = 12),
    #   model_params.num_layers = 2
    B, Ts, T, S = 2, 3, 2, 4          # slots_embeds has one extra context frame
    Dslot, Dobj, E = 32, 32, 32
    Nobj = 8
    num_layers = 2

    key = jax.random.PRNGKey(0)
    ks = jax.random.split(key, 13)

    params = {
        "slot_proj_w": 0.02 * jax.random.normal(ks[0], (Dslot, E), jnp.float32),
        "slot_proj_b": 0.01 * jax.random.normal(ks[1], (E,), jnp.float32),
        "obj_mean": 0.1 * jax.random.normal(ks[2], (Dobj,), jnp.float32),
        "obj_std": 0.5 + jnp.abs(jax.random.normal(ks[3], (Dobj,), jnp.float32)),
        "obj_ws": [
            0.02 * jax.random.normal(ks[4], (Dobj, E), jnp.float32),   # layer 0
            0.02 * jax.random.normal(ks[5], (E, E), jnp.float32),      # layer 1
            0.02 * jax.random.normal(ks[6], (E, E), jnp.float32),      # final
        ][: num_layers + 1],
        "obj_bs": [
            0.01 * jax.random.normal(ks[7], (E,), jnp.float32),
            0.01 * jax.random.normal(ks[8], (E,), jnp.float32),
            0.01 * jax.random.normal(ks[9], (E,), jnp.float32),
        ][: num_layers + 1],
    }

    slots_embeds = jax.random.normal(ks[10], (B, Ts, S, Dslot), jnp.float32)
    x = jax.random.normal(ks[11], (B, T, Nobj, Dobj), jnp.float32)
    object_level_ids = jax.random.randint(
        ks[12], (B, T, Nobj), 0, 4, dtype=jnp.int32)

    # One-time packing (hoisted off the per-step path).
    packed = pack_params(params, num_slots=S, num_objects=Nobj)

    out, out_ids, target = encode(packed, x, object_level_ids, slots_embeds,
                                  return_targets=True)
    jax.block_until_ready(out)
    jax.block_until_ready(out_ids)
    jax.block_until_ready(target)

    ref_out, ref_ids, ref_target = encode_reference(
        params, x, object_level_ids, slots_embeds)

    assert out.shape == (B, T, S + Nobj, E), out.shape
    assert out_ids.shape == (B, T, S + Nobj), out_ids.shape
    assert target.shape == (B, T, S, Dslot), target.shape
    assert jnp.allclose(out, ref_out, atol=1e-5, rtol=1e-5), \
        float(jnp.max(jnp.abs(out - ref_out)))
    assert jnp.array_equal(out_ids, ref_ids)
    assert jnp.array_equal(target, ref_target)

    print("KERNEL_OK")
</pallas_src>

<mosaic_0001>
module attributes {stable_mosaic.version = 11 : i64} {
  func.func @kernel(%arg0: i32, %arg1: memref<4x128xf32, #tpu.memory_space<vmem>>, %arg2: memref<4x256xf32, #tpu.memory_space<vmem>>, %arg3: memref<128x128xf32, #tpu.memory_space<vmem>>, %arg4: memref<1x128xf32, #tpu.memory_space<vmem>>, %arg5: memref<1x256xf32, #tpu.memory_space<vmem>>, %arg6: memref<1x256xf32, #tpu.memory_space<vmem>>, %arg7: memref<256x256xf32, #tpu.memory_space<vmem>>, %arg8: memref<1x256xf32, #tpu.memory_space<vmem>>, %arg9: memref<256x256xf32, #tpu.memory_space<vmem>>, %arg10: memref<1x256xf32, #tpu.memory_space<vmem>>, %arg11: memref<256x256xf32, #tpu.memory_space<vmem>>, %arg12: memref<1x256xf32, #tpu.memory_space<vmem>>, %arg13: memref<4x384xf32, #tpu.memory_space<vmem>>) attributes {dimension_semantics = [#tpu.dimension_semantics<parallel>], iteration_bounds = array<i64: 1>, scalar_prefetch = 0 : i64, scratch_operands = 0 : i64, tpu.core_type = #tpu.core_type<tc>, window_params = [{transform_indices = @transform_0, window_bounds = array<i64: 4, 128>}, {transform_indices = @transform_1, window_bounds = array<i64: 4, 256>}, {pipeline_mode = #tpu.pipeline_mode<synchronous>, transform_indices = @transform_2, window_bounds = array<i64: 128, 128>}, {pipeline_mode = #tpu.pipeline_mode<synchronous>, transform_indices = @transform_3, window_bounds = array<i64: 1, 128>}, {pipeline_mode = #tpu.pipeline_mode<synchronous>, transform_indices = @transform_4, window_bounds = array<i64: 1, 256>}, {pipeline_mode = #tpu.pipeline_mode<synchronous>, transform_indices = @transform_5, window_bounds = array<i64: 1, 256>}, {pipeline_mode = #tpu.pipeline_mode<synchronous>, transform_indices = @transform_6, window_bounds = array<i64: 256, 256>}, {pipeline_mode = #tpu.pipeline_mode<synchronous>, transform_indices = @transform_7, window_bounds = array<i64: 1, 256>}, {pipeline_mode = #tpu.pipeline_mode<synchronous>, transform_indices = @transform_8, window_bounds = array<i64: 256, 256>}, {pipeline_mode = #tpu.pipeline_mode<synchronous>, transform_indices = @transform_9, window_bounds = array<i64: 1, 256>}, {pipeline_mode = #tpu.pipeline_mode<synchronous>, transform_indices = @transform_10, window_bounds = array<i64: 256, 256>}, {pipeline_mode = #tpu.pipeline_mode<synchronous>, transform_indices = @transform_11, window_bounds = array<i64: 1, 256>}, {transform_indices = @transform_12, window_bounds = array<i64: 4, 384>}]} {
    %c0 = arith.constant 0 : index
    %c0_0 = arith.constant 0 : index
    %0 = vector.load %arg1[%c0, %c0_0] : memref<4x128xf32, #tpu.memory_space<vmem>>, vector<4x128xf32>
    %c0_1 = arith.constant 0 : index
    %c0_2 = arith.constant 0 : index
    %1 = vector.load %arg3[%c0_1, %c0_2] : memref<128x128xf32, #tpu.memory_space<vmem>>, vector<128x128xf32>
    %cst = arith.constant dense<0.000000e+00> : vector<4x128xf32>
    %2 = tpu.matmul %0, %1, %cst {dimension_numbers = #tpu.dot_dimension_numbers<[1], [0], [0], [1], [0, 0, 1, 1], [], []>} : vector<4x128xf32>, vector<128x128xf32>, vector<4x128xf32> -> vector<4x128xf32>
    %c0_3 = arith.constant 0 : index
    %c0_4 = arith.constant 0 : index
    %3 = vector.load %arg4[%c0_3, %c0_4] : memref<1x128xf32, #tpu.memory_space<vmem>>, vector<1x128xf32>
    %4 = vector.broadcast %3 : vector<1x128xf32> to vector<4x128xf32>
    %5 = arith.addf %2, %4 : vector<4x128xf32>
    %c0_5 = arith.constant 0 : index
    %c0_6 = arith.constant 0 : index
    %6 = vector.load %arg2[%c0_5, %c0_6] : memref<4x256xf32, #tpu.memory_space<vmem>>, vector<4x256xf32>
    %c0_7 = arith.constant 0 : index
    %c0_8 = arith.constant 0 : index
    %7 = vector.load %arg5[%c0_7, %c0_8] : memref<1x256xf32, #tpu.memory_space<vmem>>, vector<1x256xf32>
    %8 = vector.broadcast %7 : vector<1x256xf32> to vector<4x256xf32>
    %9 = arith.subf %6, %8 : vector<4x256xf32>
    %c0_9 = arith.constant 0 : index
    %c0_10 = arith.constant 0 : index
    %10 = vector.load %arg6[%c0_9, %c0_10] : memref<1x256xf32, #tpu.memory_space<vmem>>, vector<1x256xf32>
    %11 = vector.broadcast %10 : vector<1x256xf32> to vector<4x256xf32>
    %12 = arith.mulf %9, %11 : vector<4x256xf32>
    %c0_11 = arith.constant 0 : index
    %c0_12 = arith.constant 0 : index
    %13 = vector.load %arg7[%c0_11, %c0_12] : memref<256x256xf32, #tpu.memory_space<vmem>>, vector<256x256xf32>
    %cst_13 = arith.constant dense<0.000000e+00> : vector<4x256xf32>
    %14 = tpu.matmul %12, %13, %cst_13 {dimension_numbers = #tpu.dot_dimension_numbers<[1], [0], [0], [1], [0, 0, 1, 1], [], []>} : vector<4x256xf32>, vector<256x256xf32>, vector<4x256xf32> -> vector<4x256xf32>
    %c0_14 = arith.constant 0 : index
    %c0_15 = arith.constant 0 : index
    %15 = vector.load %arg8[%c0_14, %c0_15] : memref<1x256xf32, #tpu.memory_space<vmem>>, vector<1x256xf32>
    %16 = vector.broadcast %15 : vector<1x256xf32> to vector<4x256xf32>
    %17 = arith.addf %14, %16 : vector<4x256xf32>
    %cst_16 = arith.constant 5.000000e-01 : f32
    %18 = vector.broadcast %cst_16 : f32 to vector<4x256xf32>
    %19 = arith.mulf %18, %17 : vector<4x256xf32>
    %cst_17 = arith.constant 0.707106769 : f32
    %20 = vector.broadcast %cst_17 : f32 to vector<4x256xf32>
    %21 = arith.mulf %17, %20 : vector<4x256xf32>
    %22 = math.absf %21 : vector<4x256xf32>
    %cst_18 = arith.constant 0.327591091 : f32
    %23 = vector.broadcast %cst_18 : f32 to vector<4x256xf32>
    %24 = arith.mulf %23, %22 : vector<4x256xf32>
    %cst_19 = arith.constant 1.000000e+00 : f32
    %25 = vector.broadcast %cst_19 : f32 to vector<4x256xf32>
    %26 = arith.addf %25, %24 : vector<4x256xf32>
    %cst_20 = arith.constant 1.000000e+00 : f32
    %27 = vector.broadcast %cst_20 : f32 to vector<4x256xf32>
    %28 = arith.divf %27, %26 : vector<4x256xf32>
    %cst_21 = arith.constant 1.06140542 : f32
    %29 = vector.broadcast %cst_21 : f32 to vector<4x256xf32>
    %30 = arith.mulf %29, %28 : vector<4x256xf32>
    %cst_22 = arith.constant -1.45315206 : f32
    %31 = vector.broadcast %cst_22 : f32 to vector<4x256xf32>
    %32 = arith.addf %30, %31 : vector<4x256xf32>
    %33 = arith.mulf %32, %28 : vector<4x256xf32>
    %cst_23 = arith.constant 1.42141378 : f32
    %34 = vector.broadcast %cst_23 : f32 to vector<4x256xf32>
    %35 = arith.addf %33, %34 : vector<4x256xf32>
    %36 = arith.mulf %35, %28 : vector<4x256xf32>
    %cst_24 = arith.constant -0.284496725 : f32
    %37 = vector.broadcast %cst_24 : f32 to vector<4x256xf32>
    %38 = arith.addf %36, %37 : vector<4x256xf32>
    %39 = arith.mulf %38, %28 : vector<4x256xf32>
    %cst_25 = arith.constant 0.254829586 : f32
    %40 = vector.broadcast %cst_25 : f32 to vector<4x256xf32>
    %41 = arith.addf %39, %40 : vector<4x256xf32>
    %42 = arith.mulf %41, %28 : vector<4x256xf32>
    %cst_26 = arith.constant 0.000000e+00 : f32
    %43 = vector.broadcast %cst_26 : f32 to vector<4x256xf32>
    %44 = arith.subf %43, %22 : vector<4x256xf32>
    %45 = arith.mulf %44, %22 : vector<4x256xf32>
    %46 = math.exp %45 : vector<4x256xf32>
    %47 = arith.mulf %42, %46 : vector<4x256xf32>
    %cst_27 = arith.constant 1.000000e+00 : f32
    %48 = vector.broadcast %cst_27 : f32 to vector<4x256xf32>
    %49 = arith.subf %48, %47 : vector<4x256xf32>
    %cst_28 = arith.constant 0.000000e+00 : f32
    %50 = vector.broadcast %cst_28 : f32 to vector<4x256xf32>
    %51 = arith.cmpf oge, %21, %50 : vector<4x256xf32>
    %cst_29 = arith.constant 0.000000e+00 : f32
    %52 = vector.broadcast %cst_29 : f32 to vector<4x256xf32>
    %53 = arith.subf %52, %49 : vector<4x256xf32>
    %54 = arith.select %51, %49, %53 : vector<4x256xi1>, vector<4x256xf32>
    %cst_30 = arith.constant 1.000000e+00 : f32
    %55 = vector.broadcast %cst_30 : f32 to vector<4x256xf32>
    %56 = arith.addf %55, %54 : vector<4x256xf32>
    %57 = arith.mulf %19, %56 : vector<4x256xf32>
    %c0_31 = arith.constant 0 : index
    %c0_32 = arith.constant 0 : index
    %58 = vector.load %arg9[%c0_31, %c0_32] : memref<256x256xf32, #tpu.memory_space<vmem>>, vector<256x256xf32>
    %cst_33 = arith.constant dense<0.000000e+00> : vector<4x256xf32>
    %59 = tpu.matmul %57, %58, %cst_33 {dimension_numbers = #tpu.dot_dimension_numbers<[1], [0], [0], [1], [0, 0, 1, 1], [], []>} : vector<4x256xf32>, vector<256x256xf32>, vector<4x256xf32> -> vector<4x256xf32>
    %c0_34 = arith.constant 0 : index
    %c0_35 = arith.constant 0 : index
    %60 = vector.load %arg10[%c0_34, %c0_35] : memref<1x256xf32, #tpu.memory_space<vmem>>, vector<1x256xf32>
    %61 = vector.broadcast %60 : vector<1x256xf32> to vector<4x256xf32>
    %62 = arith.addf %59, %61 : vector<4x256xf32>
    %cst_36 = arith.constant 5.000000e-01 : f32
    %63 = vector.broadcast %cst_36 : f32 to vector<4x256xf32>
    %64 = arith.mulf %63, %62 : vector<4x256xf32>
    %cst_37 = arith.constant 0.707106769 : f32
    %65 = vector.broadcast %cst_37 : f32 to vector<4x256xf32>
    %66 = arith.mulf %62, %65 : vector<4x256xf32>
    %67 = math.absf %66 : vector<4x256xf32>
    %cst_38 = arith.constant 0.327591091 : f32
    %68 = vector.broadcast %cst_38 : f32 to vector<4x256xf32>
    %69 = arith.mulf %68, %67 : vector<4x256xf32>
    %cst_39 = arith.constant 1.000000e+00 : f32
    %70 = vector.broadcast %cst_39 : f32 to vector<4x256xf32>
    %71 = arith.addf %70, %69 : vector<4x256xf32>
    %cst_40 = arith.constant 1.000000e+00 : f32
    %72 = vector.broadcast %cst_40 : f32 to vector<4x256xf32>
    %73 = arith.divf %72, %71 : vector<4x256xf32>
    %cst_41 = arith.constant 1.06140542 : f32
    %74 = vector.broadcast %cst_41 : f32 to vector<4x256xf32>
    %75 = arith.mulf %74, %73 : vector<4x256xf32>
    %cst_42 = arith.constant -1.45315206 : f32
    %76 = vector.broadcast %cst_42 : f32 to vector<4x256xf32>
    %77 = arith.addf %75, %76 : vector<4x256xf32>
    %78 = arith.mulf %77, %73 : vector<4x256xf32>
    %cst_43 = arith.constant 1.42141378 : f32
    %79 = vector.broadcast %cst_43 : f32 to vector<4x256xf32>
    %80 = arith.addf %78, %79 : vector<4x256xf32>
    %81 = arith.mulf %80, %73 : vector<4x256xf32>
    %cst_44 = arith.constant -0.284496725 : f32
    %82 = vector.broadcast %cst_44 : f32 to vector<4x256xf32>
    %83 = arith.addf %81, %82 : vector<4x256xf32>
    %84 = arith.mulf %83, %73 : vector<4x256xf32>
    %cst_45 = arith.constant 0.254829586 : f32
    %85 = vector.broadcast %cst_45 : f32 to vector<4x256xf32>
    %86 = arith.addf %84, %85 : vector<4x256xf32>
    %87 = arith.mulf %86, %73 : vector<4x256xf32>
    %cst_46 = arith.constant 0.000000e+00 : f32
    %88 = vector.broadcast %cst_46 : f32 to vector<4x256xf32>
    %89 = arith.subf %88, %67 : vector<4x256xf32>
    %90 = arith.mulf %89, %67 : vector<4x256xf32>
    %91 = math.exp %90 : vector<4x256xf32>
    %92 = arith.mulf %87, %91 : vector<4x256xf32>
    %cst_47 = arith.constant 1.000000e+00 : f32
    %93 = vector.broadcast %cst_47 : f32 to vector<4x256xf32>
    %94 = arith.subf %93, %92 : vector<4x256xf32>
    %cst_48 = arith.constant 0.000000e+00 : f32
    %95 = vector.broadcast %cst_48 : f32 to vector<4x256xf32>
    %96 = arith.cmpf oge, %66, %95 : vector<4x256xf32>
    %cst_49 = arith.constant 0.000000e+00 : f32
    %97 = vector.broadcast %cst_49 : f32 to vector<4x256xf32>
    %98 = arith.subf %97, %94 : vector<4x256xf32>
    %99 = arith.select %96, %94, %98 : vector<4x256xi1>, vector<4x256xf32>
    %cst_50 = arith.constant 1.000000e+00 : f32
    %100 = vector.broadcast %cst_50 : f32 to vector<4x256xf32>
    %101 = arith.addf %100, %99 : vector<4x256xf32>
    %102 = arith.mulf %64, %101 : vector<4x256xf32>
    %c0_51 = arith.constant 0 : index
    %c0_52 = arith.constant 0 : index
    %103 = vector.load %arg11[%c0_51, %c0_52] : memref<256x256xf32, #tpu.memory_space<vmem>>, vector<256x256xf32>
    %cst_53 = arith.constant dense<0.000000e+00> : vector<4x256xf32>
    %104 = tpu.matmul %102, %103, %cst_53 {dimension_numbers = #tpu.dot_dimension_numbers<[1], [0], [0], [1], [0, 0, 1, 1], [], []>} : vector<4x256xf32>, vector<256x256xf32>, vector<4x256xf32> -> vector<4x256xf32>
    %c0_54 = arith.constant 0 : index
    %c0_55 = arith.constant 0 : index
    %105 = vector.load %arg12[%c0_54, %c0_55] : memref<1x256xf32, #tpu.memory_space<vmem>>, vector<1x256xf32>
    %106 = vector.broadcast %105 : vector<1x256xf32> to vector<4x256xf32>
    %107 = arith.addf %104, %106 : vector<4x256xf32>
    %c0_56 = arith.constant 0 : index
    %c0_57 = arith.constant 0 : index
    %108 = vector.load %arg13[%c0_56, %c0_57] : memref<4x384xf32, #tpu.memory_space<vmem>>, vector<4x128xf32>
    tpu.vector_store %arg13[%c0_56, %c0_57], %5 {strides = array<i32>} : memref<4x384xf32, #tpu.memory_space<vmem>>, vector<4x128xf32>,
    %c0_58 = arith.constant 0 : index
    %c128 = arith.constant 128 : index
    %109 = vector.load %arg13[%c0_58, %c128] : memref<4x384xf32, #tpu.memory_space<vmem>>, vector<4x256xf32>
    tpu.vector_store %arg13[%c0_58, %c128], %107 {strides = array<i32>} : memref<4x384xf32, #tpu.memory_space<vmem>>, vector<4x256xf32>,
    return
  }
  func.func @transform_0(%arg0: i32) -> (i32, i32) {
    %c0_i32 = arith.constant 0 : i32
    %c0_i32_0 = arith.constant 0 : i32
    return %arg0, %c0_i32 : i32, i32
  }
  func.func @transform_1(%arg0: i32) -> (i32, i32) {
    %c0_i32 = arith.constant 0 : i32
    %c0_i32_0 = arith.constant 0 : i32
    return %arg0, %c0_i32 : i32, i32
  }
  func.func @transform_2(%arg0: i32) -> (i32, i32) {
    %c0_i32 = arith.constant 0 : i32
    %c0_i32_0 = arith.constant 0 : i32
    %c0_i32_1 = arith.constant 0 : i32
    return %c0_i32, %c0_i32_0 : i32, i32
  }
  func.func @transform_3(%arg0: i32) -> (i32, i32) {
    %c0_i32 = arith.constant 0 : i32
    %c0_i32_0 = arith.constant 0 : i32
    %c0_i32_1 = arith.constant 0 : i32
    return %c0_i32, %c0_i32_0 : i32, i32
  }
  func.func @transform_4(%arg0: i32) -> (i32, i32) {
    %c0_i32 = arith.constant 0 : i32
    %c0_i32_0 = arith.constant 0 : i32
    %c0_i32_1 = arith.constant 0 : i32
    return %c0_i32, %c0_i32_0 : i32, i32
  }
  func.func @transform_5(%arg0: i32) -> (i32, i32) {
    %c0_i32 = arith.constant 0 : i32
    %c0_i32_0 = arith.constant 0 : i32
    %c0_i32_1 = arith.constant 0 : i32
    return %c0_i32, %c0_i32_0 : i32, i32
  }
  func.func @transform_6(%arg0: i32) -> (i32, i32) {
    %c0_i32 = arith.constant 0 : i32
    %c0_i32_0 = arith.constant 0 : i32
    %c0_i32_1 = arith.constant 0 : i32
    return %c0_i32, %c0_i32_0 : i32, i32
  }
  func.func @transform_7(%arg0: i32) -> (i32, i32) {
    %c0_i32 = arith.constant 0 : i32
    %c0_i32_0 = arith.constant 0 : i32
    %c0_i32_1 = arith.constant 0 : i32
    return %c0_i32, %c0_i32_0 : i32, i32
  }
  func.func @transform_8(%arg0: i32) -> (i32, i32) {
    %c0_i32 = arith.constant 0 : i32
    %c0_i32_0 = arith.constant 0 : i32
    %c0_i32_1 = arith.constant 0 : i32
    return %c0_i32, %c0_i32_0 : i32, i32
  }
  func.func @transform_9(%arg0: i32) -> (i32, i32) {
    %c0_i32 = arith.constant 0 : i32
    %c0_i32_0 = arith.constant 0 : i32
    %c0_i32_1 = arith.constant 0 : i32
    return %c0_i32, %c0_i32_0 : i32, i32
  }
  func.func @transform_10(%arg0: i32) -> (i32, i32) {
    %c0_i32 = arith.constant 0 : i32
    %c0_i32_0 = arith.constant 0 : i32
    %c0_i32_1 = arith.constant 0 : i32
    return %c0_i32, %c0_i32_0 : i32, i32
  }
  func.func @transform_11(%arg0: i32) -> (i32, i32) {
    %c0_i32 = arith.constant 0 : i32
    %c0_i32_0 = arith.constant 0 : i32
    %c0_i32_1 = arith.constant 0 : i32
    return %c0_i32, %c0_i32_0 : i32, i32
  }
  func.func @transform_12(%arg0: i32) -> (i32, i32) {
    %c0_i32 = arith.constant 0 : i32
    %c0_i32_0 = arith.constant 0 : i32
    return %arg0, %c0_i32 : i32, i32
  }
}

module attributes {stable_mosaic.version = 11 : i64} {
  func.func @kernel(%arg0: i32, %arg1: memref<4x128xf32, #tpu.memory_space<vmem>>, %arg2: memref<4x256xf32, #tpu.memory_space<vmem>>, %arg3: memref<128x128xf32, #tpu.memory_space<vmem>>, %arg4: memref<1x128xf32, #tpu.memory_space<vmem>>, %arg5: memref<1x256xf32, #tpu.memory_space<vmem>>, %arg6: memref<1x256xf32, #tpu.memory_space<vmem>>, %arg7: memref<256x256xf32, #tpu.memory_space<vmem>>, %arg8: memref<1x256xf32, #tpu.memory_space<vmem>>, %arg9: memref<256x256xf32, #tpu.memory_space<vmem>>, %arg10: memref<1x256xf32, #tpu.memory_space<vmem>>, %arg11: memref<256x256xf32, #tpu.memory_space<vmem>>, %arg12: memref<1x256xf32, #tpu.memory_space<vmem>>, %arg13: memref<4x384xf32, #tpu.memory_space<vmem>>) attributes {dimension_semantics = [#tpu.dimension_semantics<parallel>], iteration_bounds = array<i64: 1>, scalar_prefetch = 0 : i64, scratch_operands = 0 : i64, tpu.core_type = #tpu.core_type<tc>, window_params = [{transform_indices = @transform_0, window_bounds = array<i64: 4, 128>}, {transform_indices = @transform_1, window_bounds = array<i64: 4, 256>}, {pipeline_mode = #tpu.pipeline_mode<synchronous>, transform_indices = @transform_2, window_bounds = array<i64: 128, 128>}, {pipeline_mode = #tpu.pipeline_mode<synchronous>, transform_indices = @transform_3, window_bounds = array<i64: 1, 128>}, {pipeline_mode = #tpu.pipeline_mode<synchronous>, transform_indices = @transform_4, window_bounds = array<i64: 1, 256>}, {pipeline_mode = #tpu.pipeline_mode<synchronous>, transform_indices = @transform_5, window_bounds = array<i64: 1, 256>}, {pipeline_mode = #tpu.pipeline_mode<synchronous>, transform_indices = @transform_6, window_bounds = array<i64: 256, 256>}, {pipeline_mode = #tpu.pipeline_mode<synchronous>, transform_indices = @transform_7, window_bounds = array<i64: 1, 256>}, {pipeline_mode = #tpu.pipeline_mode<synchronous>, transform_indices = @transform_8, window_bounds = array<i64: 256, 256>}, {pipeline_mode = #tpu.pipeline_mode<synchronous>, transform_indices = @transform_9, window_bounds = array<i64: 1, 256>}, {pipeline_mode = #tpu.pipeline_mode<synchronous>, transform_indices = @transform_10, window_bounds = array<i64: 256, 256>}, {pipeline_mode = #tpu.pipeline_mode<synchronous>, transform_indices = @transform_11, window_bounds = array<i64: 1, 256>}, {transform_indices = @transform_12, window_bounds = array<i64: 4, 384>}]} {
    %c0 = arith.constant 0 : index
    %c0_0 = arith.constant 0 : index
    %0 = vector.load %arg1[%c0, %c0_0] : memref<4x128xf32, #tpu.memory_space<vmem>>, vector<4x128xf32>
    %c0_1 = arith.constant 0 : index
    %c0_2 = arith.constant 0 : index
    %1 = vector.load %arg3[%c0_1, %c0_2] : memref<128x128xf32, #tpu.memory_space<vmem>>, vector<128x128xf32>
    %cst = arith.constant dense<0.000000e+00> : vector<4x128xf32>
    %2 = tpu.matmul %0, %1, %cst {dimension_numbers = #tpu.dot_dimension_numbers<[1], [0], [0], [1], [0, 0, 1, 1], [], []>} : vector<4x128xf32>, vector<128x128xf32>, vector<4x128xf32> -> vector<4x128xf32>
    %c0_3 = arith.constant 0 : index
    %c0_4 = arith.constant 0 : index
    %3 = vector.load %arg4[%c0_3, %c0_4] : memref<1x128xf32, #tpu.memory_space<vmem>>, vector<1x128xf32>
    %4 = vector.broadcast %3 : vector<1x128xf32> to vector<4x128xf32>
    %5 = arith.addf %2, %4 : vector<4x128xf32>
    %c0_5 = arith.constant 0 : index
    %c0_6 = arith.constant 0 : index
    %6 = vector.load %arg2[%c0_5, %c0_6] : memref<4x256xf32, #tpu.memory_space<vmem>>, vector<4x256xf32>
    %c0_7 = arith.constant 0 : index
    %c0_8 = arith.constant 0 : index
    %7 = vector.load %arg5[%c0_7, %c0_8] : memref<1x256xf32, #tpu.memory_space<vmem>>, vector<1x256xf32>
    %8 = vector.broadcast %7 : vector<1x256xf32> to vector<4x256xf32>
    %9 = arith.subf %6, %8 : vector<4x256xf32>
    %c0_9 = arith.constant 0 : index
    %c0_10 = arith.constant 0 : index
    %10 = vector.load %arg6[%c0_9, %c0_10] : memref<1x256xf32, #tpu.memory_space<vmem>>, vector<1x256xf32>
    %11 = vector.broadcast %10 : vector<1x256xf32> to vector<4x256xf32>
    %12 = arith.mulf %9, %11 : vector<4x256xf32>
    %c0_11 = arith.constant 0 : index
    %c0_12 = arith.constant 0 : index
    %13 = vector.load %arg7[%c0_11, %c0_12] : memref<256x256xf32, #tpu.memory_space<vmem>>, vector<256x256xf32>
    %cst_13 = arith.constant dense<0.000000e+00> : vector<4x256xf32>
    %14 = tpu.matmul %12, %13, %cst_13 {dimension_numbers = #tpu.dot_dimension_numbers<[1], [0], [0], [1], [0, 0, 1, 1], [], []>} : vector<4x256xf32>, vector<256x256xf32>, vector<4x256xf32> -> vector<4x256xf32>
    %c0_14 = arith.constant 0 : index
    %c0_15 = arith.constant 0 : index
    %15 = vector.load %arg8[%c0_14, %c0_15] : memref<1x256xf32, #tpu.memory_space<vmem>>, vector<1x256xf32>
    %16 = vector.broadcast %15 : vector<1x256xf32> to vector<4x256xf32>
    %17 = arith.addf %14, %16 : vector<4x256xf32>
    %cst_16 = arith.constant 5.000000e-01 : f32
    %18 = vector.broadcast %cst_16 : f32 to vector<4x256xf32>
    %19 = arith.mulf %18, %17 : vector<4x256xf32>
    %cst_17 = arith.constant 0.707106769 : f32
    %20 = vector.broadcast %cst_17 : f32 to vector<4x256xf32>
    %21 = arith.mulf %17, %20 : vector<4x256xf32>
    %22 = math.absf %21 : vector<4x256xf32>
    %cst_18 = arith.constant 0.327591091 : f32
    %23 = vector.broadcast %cst_18 : f32 to vector<4x256xf32>
    %24 = arith.mulf %23, %22 : vector<4x256xf32>
    %cst_19 = arith.constant 1.000000e+00 : f32
    %25 = vector.broadcast %cst_19 : f32 to vector<4x256xf32>
    %26 = arith.addf %25, %24 : vector<4x256xf32>
    %cst_20 = arith.constant 1.000000e+00 : f32
    %27 = vector.broadcast %cst_20 : f32 to vector<4x256xf32>
    %28 = arith.divf %27, %26 : vector<4x256xf32>
    %cst_21 = arith.constant 1.06140542 : f32
    %29 = vector.broadcast %cst_21 : f32 to vector<4x256xf32>
    %30 = arith.mulf %29, %28 : vector<4x256xf32>
    %cst_22 = arith.constant -1.45315206 : f32
    %31 = vector.broadcast %cst_22 : f32 to vector<4x256xf32>
    %32 = arith.addf %30, %31 : vector<4x256xf32>
    %33 = arith.mulf %32, %28 : vector<4x256xf32>
    %cst_23 = arith.constant 1.42141378 : f32
    %34 = vector.broadcast %cst_23 : f32 to vector<4x256xf32>
    %35 = arith.addf %33, %34 : vector<4x256xf32>
    %36 = arith.mulf %35, %28 : vector<4x256xf32>
    %cst_24 = arith.constant -0.284496725 : f32
    %37 = vector.broadcast %cst_24 : f32 to vector<4x256xf32>
    %38 = arith.addf %36, %37 : vector<4x256xf32>
    %39 = arith.mulf %38, %28 : vector<4x256xf32>
    %cst_25 = arith.constant 0.254829586 : f32
    %40 = vector.broadcast %cst_25 : f32 to vector<4x256xf32>
    %41 = arith.addf %39, %40 : vector<4x256xf32>
    %42 = arith.mulf %41, %28 : vector<4x256xf32>
    %cst_26 = arith.constant 0.000000e+00 : f32
    %43 = vector.broadcast %cst_26 : f32 to vector<4x256xf32>
    %44 = arith.subf %43, %22 : vector<4x256xf32>
    %45 = arith.mulf %44, %22 : vector<4x256xf32>
    %46 = math.exp %45 : vector<4x256xf32>
    %47 = arith.mulf %42, %46 : vector<4x256xf32>
    %cst_27 = arith.constant 1.000000e+00 : f32
    %48 = vector.broadcast %cst_27 : f32 to vector<4x256xf32>
    %49 = arith.subf %48, %47 : vector<4x256xf32>
    %cst_28 = arith.constant 0.000000e+00 : f32
    %50 = vector.broadcast %cst_28 : f32 to vector<4x256xf32>
    %51 = arith.cmpf oge, %21, %50 : vector<4x256xf32>
    %cst_29 = arith.constant 0.000000e+00 : f32
    %52 = vector.broadcast %cst_29 : f32 to vector<4x256xf32>
    %53 = arith.subf %52, %49 : vector<4x256xf32>
    %54 = arith.select %51, %49, %53 : vector<4x256xi1>, vector<4x256xf32>
    %cst_30 = arith.constant 1.000000e+00 : f32
    %55 = vector.broadcast %cst_30 : f32 to vector<4x256xf32>
    %56 = arith.addf %55, %54 : vector<4x256xf32>
    %57 = arith.mulf %19, %56 : vector<4x256xf32>
    %c0_31 = arith.constant 0 : index
    %c0_32 = arith.constant 0 : index
    %58 = vector.load %arg9[%c0_31, %c0_32] : memref<256x256xf32, #tpu.memory_space<vmem>>, vector<256x256xf32>
    %cst_33 = arith.constant dense<0.000000e+00> : vector<4x256xf32>
    %59 = tpu.matmul %57, %58, %cst_33 {dimension_numbers = #tpu.dot_dimension_numbers<[1], [0], [0], [1], [0, 0, 1, 1], [], []>} : vector<4x256xf32>, vector<256x256xf32>, vector<4x256xf32> -> vector<4x256xf32>
    %c0_34 = arith.constant 0 : index
    %c0_35 = arith.constant 0 : index
    %60 = vector.load %arg10[%c0_34, %c0_35] : memref<1x256xf32, #tpu.memory_space<vmem>>, vector<1x256xf32>
    %61 = vector.broadcast %60 : vector<1x256xf32> to vector<4x256xf32>
    %62 = arith.addf %59, %61 : vector<4x256xf32>
    %cst_36 = arith.constant 5.000000e-01 : f32
    %63 = vector.broadcast %cst_36 : f32 to vector<4x256xf32>
    %64 = arith.mulf %63, %62 : vector<4x256xf32>
    %cst_37 = arith.constant 0.707106769 : f32
    %65 = vector.broadcast %cst_37 : f32 to vector<4x256xf32>
    %66 = arith.mulf %62, %65 : vector<4x256xf32>
    %67 = math.absf %66 : vector<4x256xf32>
    %cst_38 = arith.constant 0.327591091 : f32
    %68 = vector.broadcast %cst_38 : f32 to vector<4x256xf32>
    %69 = arith.mulf %68, %67 : vector<4x256xf32>
    %cst_39 = arith.constant 1.000000e+00 : f32
    %70 = vector.broadcast %cst_39 : f32 to vector<4x256xf32>
    %71 = arith.addf %70, %69 : vector<4x256xf32>
    %cst_40 = arith.constant 1.000000e+00 : f32
    %72 = vector.broadcast %cst_40 : f32 to vector<4x256xf32>
    %73 = arith.divf %72, %71 : vector<4x256xf32>
    %cst_41 = arith.constant 1.06140542 : f32
    %74 = vector.broadcast %cst_41 : f32 to vector<4x256xf32>
    %75 = arith.mulf %74, %73 : vector<4x256xf32>
    %cst_42 = arith.constant -1.45315206 : f32
    %76 = vector.broadcast %cst_42 : f32 to vector<4x256xf32>
    %77 = arith.addf %75, %76 : vector<4x256xf32>
    %78 = arith.mulf %77, %73 : vector<4x256xf32>
    %cst_43 = arith.constant 1.42141378 : f32
    %79 = vector.broadcast %cst_43 : f32 to vector<4x256xf32>
    %80 = arith.addf %78, %79 : vector<4x256xf32>
    %81 = arith.mulf %80, %73 : vector<4x256xf32>
    %cst_44 = arith.constant -0.284496725 : f32
    %82 = vector.broadcast %cst_44 : f32 to vector<4x256xf32>
    %83 = arith.addf %81, %82 : vector<4x256xf32>
    %84 = arith.mulf %83, %73 : vector<4x256xf32>
    %cst_45 = arith.constant 0.254829586 : f32
    %85 = vector.broadcast %cst_45 : f32 to vector<4x256xf32>
    %86 = arith.addf %84, %85 : vector<4x256xf32>
    %87 = arith.mulf %86, %73 : vector<4x256xf32>
    %cst_46 = arith.constant 0.000000e+00 : f32
    %88 = vector.broadcast %cst_46 : f32 to vector<4x256xf32>
    %89 = arith.subf %88, %67 : vector<4x256xf32>
    %90 = arith.mulf %89, %67 : vector<4x256xf32>
    %91 = math.exp %90 : vector<4x256xf32>
    %92 = arith.mulf %87, %91 : vector<4x256xf32>
    %cst_47 = arith.constant 1.000000e+00 : f32
    %93 = vector.broadcast %cst_47 : f32 to vector<4x256xf32>
    %94 = arith.subf %93, %92 : vector<4x256xf32>
    %cst_48 = arith.constant 0.000000e+00 : f32
    %95 = vector.broadcast %cst_48 : f32 to vector<4x256xf32>
    %96 = arith.cmpf oge, %66, %95 : vector<4x256xf32>
    %cst_49 = arith.constant 0.000000e+00 : f32
    %97 = vector.broadcast %cst_49 : f32 to vector<4x256xf32>
    %98 = arith.subf %97, %94 : vector<4x256xf32>
    %99 = arith.select %96, %94, %98 : vector<4x256xi1>, vector<4x256xf32>
    %cst_50 = arith.constant 1.000000e+00 : f32
    %100 = vector.broadcast %cst_50 : f32 to vector<4x256xf32>
    %101 = arith.addf %100, %99 : vector<4x256xf32>
    %102 = arith.mulf %64, %101 : vector<4x256xf32>
    %c0_51 = arith.constant 0 : index
    %c0_52 = arith.constant 0 : index
    %103 = vector.load %arg11[%c0_51, %c0_52] : memref<256x256xf32, #tpu.memory_space<vmem>>, vector<256x256xf32>
    %cst_53 = arith.constant dense<0.000000e+00> : vector<4x256xf32>
    %104 = tpu.matmul %102, %103, %cst_53 {dimension_numbers = #tpu.dot_dimension_numbers<[1], [0], [0], [1], [0, 0, 1, 1], [], []>} : vector<4x256xf32>, vector<256x256xf32>, vector<4x256xf32> -> vector<4x256xf32>
    %c0_54 = arith.constant 0 : index
    %c0_55 = arith.constant 0 : index
    %105 = vector.load %arg12[%c0_54, %c0_55] : memref<1x256xf32, #tpu.memory_space<vmem>>, vector<1x256xf32>
    %106 = vector.broadcast %105 : vector<1x256xf32> to vector<4x256xf32>
    %107 = arith.addf %104, %106 : vector<4x256xf32>
    %c0_56 = arith.constant 0 : index
    %c0_57 = arith.constant 0 : index
    %108 = vector.load %arg13[%c0_56, %c0_57] : memref<4x384xf32, #tpu.memory_space<vmem>>, vector<4x128xf32>
    tpu.vector_store %arg13[%c0_56, %c0_57], %5 {strides = array<i32>} : memref<4x384xf32, #tpu.memory_space<vmem>>, vector<4x128xf32>,
    %c0_58 = arith.constant 0 : index
    %c128 = arith.constant 128 : index
    %109 = vector.load %arg13[%c0_58, %c128] : memref<4x384xf32, #tpu.memory_space<vmem>>, vector<4x256xf32>
    tpu.vector_store %arg13[%c0_58, %c128], %107 {strides = array<i32>} : memref<4x384xf32, #tpu.memory_space<vmem>>, vector<4x256xf32>,
    return
  }
  func.func @transform_0(%arg0: i32) -> (i32, i32) {
    %c0_i32 = arith.constant 0 : i32
    %c0_i32_0 = arith.constant 0 : i32
    return %arg0, %c0_i32 : i32, i32
  }
  func.func @transform_1(%arg0: i32) -> (i32, i32) {
    %c0_i32 = arith.constant 0 : i32
    %c0_i32_0 = arith.constant 0 : i32
    return %arg0, %c0_i32 : i32, i32
  }
  func.func @transform_2(%arg0: i32) -> (i32, i32) {
    %c0_i32 = arith.constant 0 : i32
    %c0_i32_0 = arith.constant 0 : i32
    %c0_i32_1 = arith.constant 0 : i32
    return %c0_i32, %c0_i32_0 : i32, i32
  }
  func.func @transform_3(%arg0: i32) -> (i32, i32) {
    %c0_i32 = arith.constant 0 : i32
    %c0_i32_0 = arith.constant 0 : i32
    %c0_i32_1 = arith.constant 0 : i32
    return %c0_i32, %c0_i32_0 : i32, i32
  }
  func.func @transform_4(%arg0: i32) -> (i32, i32) {
    %c0_i32 = arith.constant 0 : i32
    %c0_i32_0 = arith.constant 0 : i32
    %c0_i32_1 = arith.constant 0 : i32
    return %c0_i32, %c0_i32_0 : i32, i32
  }
  func.func @transform_5(%arg0: i32) -> (i32, i32) {
    %c0_i32 = arith.constant 0 : i32
    %c0_i32_0 = arith.constant 0 : i32
    %c0_i32_1 = arith.constant 0 : i32
    return %c0_i32, %c0_i32_0 : i32, i32
  }
  func.func @transform_6(%arg0: i32) -> (i32, i32) {
    %c0_i32 = arith.constant 0 : i32
    %c0_i32_0 = arith.constant 0 : i32
    %c0_i32_1 = arith.constant 0 : i32
    return %c0_i32, %c0_i32_0 : i32, i32
  }
  func.func @transform_7(%arg0: i32) -> (i32, i32) {
    %c0_i32 = arith.constant 0 : i32
    %c0_i32_0 = arith.constant 0 : i32
    %c0_i32_1 = arith.constant 0 : i32
    return %c0_i32, %c0_i32_0 : i32, i32
  }
  func.func @transform_8(%arg0: i32) -> (i32, i32) {
    %c0_i32 = arith.constant 0 : i32
    %c0_i32_0 = arith.constant 0 : i32
    %c0_i32_1 = arith.constant 0 : i32
    return %c0_i32, %c0_i32_0 : i32, i32
  }
  func.func @transform_9(%arg0: i32) -> (i32, i32) {
    %c0_i32 = arith.constant 0 : i32
    %c0_i32_0 = arith.constant 0 : i32
    %c0_i32_1 = arith.constant 0 : i32
    return %c0_i32, %c0_i32_0 : i32, i32
  }
  func.func @transform_10(%arg0: i32) -> (i32, i32) {
    %c0_i32 = arith.constant 0 : i32
    %c0_i32_0 = arith.constant 0 : i32
    %c0_i32_1 = arith.constant 0 : i32
    return %c0_i32, %c0_i32_0 : i32, i32
  }
  func.func @transform_11(%arg0: i32) -> (i32, i32) {
    %c0_i32 = arith.constant 0 : i32
    %c0_i32_0 = arith.constant 0 : i32
    %c0_i32_1 = arith.constant 0 : i32
    return %c0_i32, %c0_i32_0 : i32, i32
  }
  func.func @transform_12(%arg0: i32) -> (i32, i32) {
    %c0_i32 = arith.constant 0 : i32
    %c0_i32_0 = arith.constant 0 : i32
    return %arg0, %c0_i32 : i32, i32
  }
}

</mosaic_0001>

<llo_original>
// kernel: tpu_custom_call.1
$region0: #{tpu_custom_call.1}
  #allocation0 [shape = 'u32[]', space=smem, size = 0x4, offset = 0x4, fixed_abs, tag = 'smem constant byte address 0x4 - core index']
  #allocation1 [shape = 'u32[144,128]{1,0:T(1,128)}', space=vmem, size = 0x12000, scoped, tag = 'internal scratch']
  %s0 = inlined_call_operand.hbm [shape: f32[4,128], index: 0, kind: input, shape index: {}]
  %s1 = inlined_call_operand.hbm [shape: f32[4,256], index: 1, kind: input, shape index: {}]
  %s2 = inlined_call_operand.hbm [shape: f32[128,128], index: 2, kind: input, shape index: {}]
  %s3 = inlined_call_operand.hbm [shape: f32[1,128], index: 3, kind: input, shape index: {}]
  %s4 = inlined_call_operand.vmem [shape: f32[1,256], index: 4, kind: input, shape index: {}]
  %s5 = inlined_call_operand.vmem [shape: f32[1,256], index: 5, kind: input, shape index: {}]
  %s6 = inlined_call_operand.hbm [shape: f32[256,256], index: 6, kind: input, shape index: {}]
  %s7 = inlined_call_operand.vmem [shape: f32[1,256], index: 7, kind: input, shape index: {}]
  %s8 = inlined_call_operand.hbm [shape: f32[256,256], index: 8, kind: input, shape index: {}]
  %s9 = inlined_call_operand.vmem [shape: f32[1,256], index: 9, kind: input, shape index: {}]
  %s10 = inlined_call_operand.hbm [shape: f32[256,256], index: 10, kind: input, shape index: {}]
  %s11 = inlined_call_operand.vmem [shape: f32[1,256], index: 11, kind: input, shape index: {}]
  %s12 = inlined_call_operand.hbm [shape: f32[4,384], index: 12, kind: output, shape index: {}]
  %s13 = sld [smem:[#allocation0]]
  $region86: #{tpu_custom_call.1} parent=0
    _
  %s15 = ssub.s32 1, %s13
  %s16 = scalar_select 0, %s15, %s13
  $region1: #{tpu_custom_call.1} parent=0
    #allocation2 [shape = 'u8[2048]{0}', space=vmem, size = 0x800, scoped, tag = 'input window, operand 0, single buffered']
    #allocation3 [shape = 's32[1]{0}', space=sflag, size = 0x4, scoped, tag = 'scoped memory for tpu_custom_call.1']
    #allocation4 [shape = 's32[1]{0}', space=sflag, size = 0x4, scoped, tag = 'scoped memory for tpu_custom_call.1']
    #allocation5 [shape = 'u8[4096]{0}', space=vmem, size = 0x1000, scoped, tag = 'input window, operand 1, single buffered']
    #allocation6 [shape = 's32[1]{0}', space=sflag, size = 0x4, scoped, tag = 'scoped memory for tpu_custom_call.1']
    #allocation7 [shape = 'u8[65536]{0}', space=vmem, size = 0x10000, scoped, tag = 'input window, operand 2, single buffered']
    #allocation8 [shape = 'u8[512]{0}', space=vmem, size = 0x400, scoped, tag = 'input window, operand 3, single buffered']
    #allocation9 [shape = 's32[1]{0}', space=sflag, size = 0x4, scoped, tag = 'scoped memory for tpu_custom_call.1']
    #allocation10 [shape = 'u8[262144]{0}', space=vmem, size = 0x40000, scoped, tag = 'input window, operand 6, single buffered']
    #allocation11 [shape = 'u8[262144]{0}', space=vmem, size = 0x40000, scoped, tag = 'input window, operand 8, single buffered']
    #allocation12 [shape = 's32[1]{0}', space=sflag, size = 0x4, scoped, tag = 'scoped memory for tpu_custom_call.1']
    #allocation13 [shape = 'u8[262144]{0}', space=vmem, size = 0x40000, scoped, tag = 'input window, operand 10, single buffered']
    #allocation14 [shape = 'u8[6144]{0}', space=vmem, size = 0x1800, scoped, tag = 'output window, operand 0, single buffered']
    %17 = vsyncpa [#allocation3], 0
    %18 = vsyncpa [#allocation6], 0
    %19 = vsyncpa [#allocation9], 0
    %20 = vsyncpa [#allocation12], 0
    %21 = vsyncpa [#allocation4], 0
    // Predicated region
    $region2: #{tpu_custom_call.1} parent=1 // pred_check
      _
    $region3: #{tpu_custom_call.1} parent=1 // pred_check_branch
      %23 = sbr.rel (0) target = $region5
    $region4: #{tpu_custom_call.1} parent=1 // pred_region
      %s25 = ssub.s32 64, 64
      %26 = vsyncadd [#allocation3], %s25
      %s28 = sshll.u32 [#allocation2], 4
      %s29 = int_to_ptr.vmem [resolvable:$true] %s28
      %31 = dma.hbm_to_vmem [thread:$0]  %s0, 64, %s29, [#allocation3]
    $region5: #{tpu_custom_call.1} parent=1 // pred_fallthru
      _
    // Predicated region
    $region6: #{tpu_custom_call.1} parent=1 // pred_check
      _
    $region7: #{tpu_custom_call.1} parent=1 // pred_check_branch
      %33 = sbr.rel (0) target = $region9
    $region8: #{tpu_custom_call.1} parent=1 // pred_region
      %s35 = ssub.s32 128, 128
      %36 = vsyncadd [#allocation6], %s35
      %s38 = sshll.u32 [#allocation5], 4
      %s39 = int_to_ptr.vmem [resolvable:$true] %s38
      %41 = dma.hbm_to_vmem [thread:$0]  %s1, 128, %s39, [#allocation6]
    $region9: #{tpu_custom_call.1} parent=1 // pred_fallthru
      _
    // Predicated region
    $region10: #{tpu_custom_call.1} parent=1 // pred_check
      _
    $region11: #{tpu_custom_call.1} parent=1 // pred_check_branch
      %43 = sbr.rel (0) target = $region13
    $region12: #{tpu_custom_call.1} parent=1 // pred_region
      %s45 = ssub.s32 2048, 2048
      %46 = vsyncadd [#allocation6], %s45
      %s47 = sshll.u32 [#allocation7], 4
      %s48 = int_to_ptr.vmem [resolvable:$true] %s47
      %53 = dma.hbm_to_vmem [thread:$0]  %s2, 2048, %s48, [#allocation6], 128, 128, 8
    $region13: #{tpu_custom_call.1} parent=1 // pred_fallthru
      _
    // Predicated region
    $region14: #{tpu_custom_call.1} parent=1 // pred_check
      _
    $region15: #{tpu_custom_call.1} parent=1 // pred_check_branch
      %55 = sbr.rel (0) target = $region17
    $region16: #{tpu_custom_call.1} parent=1 // pred_region
      %s57 = ssub.s32 16, 16
      %58 = vsyncadd [#allocation9], %s57
      %s60 = sshll.u32 [#allocation8], 4
      %s61 = int_to_ptr.vmem [resolvable:$true] %s60
      %63 = dma.hbm_to_vmem [thread:$0]  %s3, 16, %s61, [#allocation9]
    $region17: #{tpu_custom_call.1} parent=1 // pred_fallthru
      _
    // Predicated region
    $region18: #{tpu_custom_call.1} parent=1 // pred_check
      _
    $region19: #{tpu_custom_call.1} parent=1 // pred_check_branch
      %65 = sbr.rel (0) target = $region21
    $region20: #{tpu_custom_call.1} parent=1 // pred_region
      _
    $region21: #{tpu_custom_call.1} parent=1 // pred_fallthru
      _
    // Predicated region
    $region22: #{tpu_custom_call.1} parent=1 // pred_check
      _
    $region23: #{tpu_custom_call.1} parent=1 // pred_check_branch
      %67 = sbr.rel (0) target = $region25
    $region24: #{tpu_custom_call.1} parent=1 // pred_region
      _
    $region25: #{tpu_custom_call.1} parent=1 // pred_fallthru
      _
    // Predicated region
    $region26: #{tpu_custom_call.1} parent=1 // pred_check
      _
    $region27: #{tpu_custom_call.1} parent=1 // pred_check_branch
      %69 = sbr.rel (0) target = $region29
    $region28: #{tpu_custom_call.1} parent=1 // pred_region
      %s71 = ssub.s32 8192, 8192
      %72 = vsyncadd [#allocation9], %s71
      %s73 = sshll.u32 [#allocation10], 4
      %s74 = int_to_ptr.vmem [resolvable:$true] %s73
      %79 = dma.hbm_to_vmem [thread:$0]  %s6, 8192, %s74, [#allocation9], 256, 256, 16
    $region29: #{tpu_custom_call.1} parent=1 // pred_fallthru
      _
    // Predicated region
    $region30: #{tpu_custom_call.1} parent=1 // pred_check
      _
    $region31: #{tpu_custom_call.1} parent=1 // pred_check_branch
      %81 = sbr.rel (0) target = $region33
    $region32: #{tpu_custom_call.1} parent=1 // pred_region
      _
    $region33: #{tpu_custom_call.1} parent=1 // pred_fallthru
      _
    // Predicated region
    $region34: #{tpu_custom_call.1} parent=1 // pred_check
      _
    $region35: #{tpu_custom_call.1} parent=1 // pred_check_branch
      %83 = sbr.rel (0) target = $region37
    $region36: #{tpu_custom_call.1} parent=1 // pred_region
      %s85 = ssub.s32 8192, 8192
      %86 = vsyncadd [#allocation12], %s85
      %s87 = sshll.u32 [#allocation11], 4
      %s88 = int_to_ptr.vmem [resolvable:$true] %s87
      %93 = dma.hbm_to_vmem [thread:$0]  %s8, 8192, %s88, [#allocation12], 256, 256, 16
    $region37: #{tpu_custom_call.1} parent=1 // pred_fallthru
      _
    // Predicated region
    $region38: #{tpu_custom_call.1} parent=1 // pred_check
      _
    $region39: #{tpu_custom_call.1} parent=1 // pred_check_branch
      %95 = sbr.rel (0) target = $region41
    $region40: #{tpu_custom_call.1} parent=1 // pred_region
      _
    $region41: #{tpu_custom_call.1} parent=1 // pred_fallthru
      _
    // Predicated region
    $region42: #{tpu_custom_call.1} parent=1 // pred_check
      _
    $region43: #{tpu_custom_call.1} parent=1 // pred_check_branch
      %97 = sbr.rel (0) target = $region45
    $region44: #{tpu_custom_call.1} parent=1 // pred_region
      %s99 = ssub.s32 8192, 8192
      %100 = vsyncadd [#allocation12], %s99
      %s101 = sshll.u32 [#allocation13], 4
      %s102 = int_to_ptr.vmem [resolvable:$true] %s101
      %107 = dma.hbm_to_vmem [thread:$0]  %s10, 8192, %s102, [#allocation12], 256, 256, 16
    $region45: #{tpu_custom_call.1} parent=1 // pred_fallthru
      _
    // Predicated region
    $region46: #{tpu_custom_call.1} parent=1 // pred_check
      _
    $region47: #{tpu_custom_call.1} parent=1 // pred_check_branch
      %109 = sbr.rel (0) target = $region49
    $region48: #{tpu_custom_call.1} parent=1 // pred_region
      _
    $region49: #{tpu_custom_call.1} parent=1 // pred_fallthru
      _
    // Predicated region
    $region50: #{tpu_custom_call.1} parent=1 // pred_check
      _
    $region51: #{tpu_custom_call.1} parent=1 // pred_check_branch
      %111 = sbr.rel (0) target = $region53
    $region52: #{tpu_custom_call.1} parent=1 // pred_region
      %112 = dma.done [#allocation3], 64
    $region53: #{tpu_custom_call.1} parent=1 // pred_fallthru
      _
    // Predicated region
    $region54: #{tpu_custom_call.1} parent=1 // pred_check
      _
    $region55: #{tpu_custom_call.1} parent=1 // pred_check_branch
      %114 = sbr.rel (0) target = $region57
    $region56: #{tpu_custom_call.1} parent=1 // pred_region
      %115 = dma.done [#allocation6], 128
    $region57: #{tpu_custom_call.1} parent=1 // pred_fallthru
      _
    // Predicated region
    $region58: #{tpu_custom_call.1} parent=1 // pred_check
      _
    $region59: #{tpu_custom_call.1} parent=1 // pred_check_branch
      %117 = sbr.rel (0) target = $region61
    $region60: #{tpu_custom_call.1} parent=1 // pred_region
      %118 = dma.done [#allocation6], 2048
    $region61: #{tpu_custom_call.1} parent=1 // pred_fallthru
      _
    // Predicated region
    $region62: #{tpu_custom_call.1} parent=1 // pred_check
      _
    $region63: #{tpu_custom_call.1} parent=1 // pred_check_branch
      %120 = sbr.rel (0) target = $region65
    $region64: #{tpu_custom_call.1} parent=1 // pred_region
      %121 = dma.done [#allocation9], 16
    $region65: #{tpu_custom_call.1} parent=1 // pred_fallthru
      _
    // Predicated region
    $region66: #{tpu_custom_call.1} parent=1 // pred_check
      _
    $region67: #{tpu_custom_call.1} parent=1 // pred_check_branch
      %123 = sbr.rel (0) target = $region69
    $region68: #{tpu_custom_call.1} parent=1 // pred_region
      %124 = dma.done [#allocation9], 8192
    $region69: #{tpu_custom_call.1} parent=1 // pred_fallthru
      _
    // Predicated region
    $region70: #{tpu_custom_call.1} parent=1 // pred_check
      _
    $region71: #{tpu_custom_call.1} parent=1 // pred_check_branch
      %126 = sbr.rel (0) target = $region73
    $region72: #{tpu_custom_call.1} parent=1 // pred_region
      %127 = dma.done [#allocation12], 8192
    $region73: #{tpu_custom_call.1} parent=1 // pred_fallthru
      _
    // Predicated region
    $region74: #{tpu_custom_call.1} parent=1 // pred_check
      _
    $region75: #{tpu_custom_call.1} parent=1 // pred_check_branch
      %129 = sbr.rel (0) target = $region77
    $region76: #{tpu_custom_call.1} parent=1 // pred_region
      %130 = dma.done [#allocation12], 8192
    $region77: #{tpu_custom_call.1} parent=1 // pred_fallthru
      _
    %v131 = vld [vmem:[#allocation2] sm:$0xf]
    %v132 = vld [vmem:[#allocation7] sm:$0xff]
    %v133 = vld [vmem:[#allocation7 + $0x8] sm:$0xff]
    %v134 = vld [vmem:[#allocation7 + $0x10] sm:$0xff]
    %v135 = vld [vmem:[#allocation7 + $0x18] sm:$0xff]
    %v136 = vld [vmem:[#allocation7 + $0x20] sm:$0xff]
    %v137 = vld [vmem:[#allocation7 + $0x28] sm:$0xff]
    %v138 = vld [vmem:[#allocation7 + $0x30] sm:$0xff]
    %v139 = vld [vmem:[#allocation7 + $0x38] sm:$0xff]
    %v140 = vld [vmem:[#allocation7 + $0x40] sm:$0xff]
    %v141 = vld [vmem:[#allocation7 + $0x48] sm:$0xff]
    %v142 = vld [vmem:[#allocation7 + $0x50] sm:$0xff]
    %v143 = vld [vmem:[#allocation7 + $0x58] sm:$0xff]
    %v144 = vld [vmem:[#allocation7 + $0x60] sm:$0xff]
    %v145 = vld [vmem:[#allocation7 + $0x68] sm:$0xff]
    %v146 = vld [vmem:[#allocation7 + $0x70] sm:$0xff]
    %v147 = vld [vmem:[#allocation7 + $0x78] sm:$0xff]
    %v148 = vld [vmem:[#allocation8] sm:$0x1]
    %v150 = vlaneseq
    %v151 = vshrl.u32 %v150, 7
    %v152 = vsub.s32 0, %v151
    %v153 = vrot.slane %v148, %v152
    %155 = vmatprep.subr.mxu0 0.0
    %156 = vmatpush1.msra.mxu0 %v147
    %157 = vmatprep.subr.mxu0 0.0
    %158 = vmatpush1.msra.mxu0 %v146
    %159 = vmatprep.subr.mxu0 0.0
    %160 = vmatpush1.msra.mxu0 %v145
    %161 = vmatprep.subr.mxu0 0.0
    %162 = vmatpush1.msra.mxu0 %v144
    %163 = vmatprep.subr.mxu0 0.0
    %164 = vmatpush1.msra.mxu0 %v143
    %165 = vmatprep.subr.mxu0 0.0
    %166 = vmatpush1.msra.mxu0 %v142
    %167 = vmatprep.subr.mxu0 0.0
    %168 = vmatpush1.msra.mxu0 %v141
    %169 = vmatprep.subr.mxu0 0.0
    %170 = vmatpush1.msra.mxu0 %v140
    %171 = vmatprep.subr.mxu0 0.0
    %172 = vmatpush1.msra.mxu0 %v139
    %173 = vmatprep.subr.mxu0 0.0
    %174 = vmatpush1.msra.mxu0 %v138
    %175 = vmatprep.subr.mxu0 0.0
    %176 = vmatpush1.msra.mxu0 %v137
    %177 = vmatprep.subr.mxu0 0.0
    %178 = vmatpush1.msra.mxu0 %v136
    %179 = vmatprep.subr.mxu0 0.0
    %180 = vmatpush1.msra.mxu0 %v135
    %181 = vmatprep.subr.mxu0 0.0
    %182 = vmatpush1.msra.mxu0 %v134
    %183 = vmatprep.subr.mxu0 0.0
    %184 = vmatpush1.msra.mxu0 %v133
    %185 = vmatprep.subr.mxu0 0.0
    %186 = vmatpush1.msra.mxu0 %v132
    %187 = vmatprep.subr.mxu0 0.0
    %188 = vmatpush2.msra.mxu0 0.0
    %189 = vmatprep.subr.mxu0 0.0
    %190 = vmatpush2.msra.mxu0 0.0
    %191 = vmatprep.subr.mxu0 0.0
    %192 = vmatpush2.msra.mxu0 0.0
    %193 = vmatprep.subr.mxu0 0.0
    %194 = vmatpush2.msra.mxu0 0.0
    %195 = vmatprep.subr.mxu0 0.0
    %196 = vmatpush2.msra.mxu0 0.0
    %197 = vmatprep.subr.mxu0 0.0
    %198 = vmatpush2.msra.mxu0 0.0
    %199 = vmatprep.subr.mxu0 0.0
    %200 = vmatpush2.msra.mxu0 0.0
    %201 = vmatprep.subr.mxu0 0.0
    %202 = vmatpush2.msra.mxu0 0.0
    %203 = vmatprep.subr.mxu0 0.0
    %204 = vmatpush2.msra.mxu0 0.0
    %205 = vmatprep.subr.mxu0 0.0
    %206 = vmatpush2.msra.mxu0 0.0
    %207 = vmatprep.subr.mxu0 0.0
    %208 = vmatpush2.msra.mxu0 0.0
    %209 = vmatprep.subr.mxu0 0.0
    %210 = vmatpush2.msra.mxu0 0.0
    %211 = vmatprep.subr.mxu0 0.0
    %212 = vmatpush2.msra.mxu0 0.0
    %213 = vmatprep.subr.mxu0 0.0
    %214 = vmatpush2.msra.mxu0 0.0
    %215 = vmatprep.subr.mxu0 0.0
    %216 = vmatpush2.msra.mxu0 0.0
    %217 = vmatprep.subr.mxu0 0.0
    %218 = vmatpush2.msra.mxu0 0.0
    %219 = vmatprep.mubr.f32.mxu0 0.0
    %220 = vmatmul.mubr.f32.gmra.mxu0 %v131
    %v221 = vpop.f32.mrf.mxu0
    %v222 = vadd.f32 %v153, %v221
    %v223 = vpop.f32.mrf.mxu0
    %224 = vdwg.mxu0
    %v225 = vld [vmem:[#allocation5] sm:$0xff]
    %v226 = vld [vmem:[%s4] sm:$0x3]
    %v228 = vlaneseq
    %v229 = vshrl.u32 %v228, 7
    %v230 = vsub.s32 0, %v229
    %v231 = vrot.slane %v226, %v230
    %v232 = vlaneseq
    %v233 = vshrl.u32 %v232, 7
    %v234 = vsub.s32 1, %v233
    %v235 = vrot.slane %v226, %v234
    %v236 = vcombine.low %v231, %v235
    %v238 = vsub.f32 %v225, %v236
    %v239 = vld [vmem:[%s5] sm:$0x3]
    %v241 = vlaneseq
    %v242 = vshrl.u32 %v241, 7
    %v243 = vsub.s32 0, %v242
    %v244 = vrot.slane %v239, %v243
    %v245 = vlaneseq
    %v246 = vshrl.u32 %v245, 7
    %v247 = vsub.s32 1, %v246
    %v248 = vrot.slane %v239, %v247
    %v249 = vcombine.low %v244, %v248
    %v251 = vmul.f32 %v238, %v249
    %v252 = vld [vmem:[#allocation10] sm:$0xff]
    %v253 = vld [vmem:[#allocation10 + $0x8] sm:$0xff]
    %v254 = vld [vmem:[#allocation10 + $0x10] sm:$0xff]
    %v255 = vld [vmem:[#allocation10 + $0x18] sm:$0xff]
    %v256 = vld [vmem:[#allocation10 + $0x20] sm:$0xff]
    %v257 = vld [vmem:[#allocation10 + $0x28] sm:$0xff]
    %v258 = vld [vmem:[#allocation10 + $0x30] sm:$0xff]
    %v259 = vld [vmem:[#allocation10 + $0x38] sm:$0xff]
    %v260 = vld [vmem:[#allocation10 + $0x40] sm:$0xff]
    %v261 = vld [vmem:[#allocation10 + $0x48] sm:$0xff]
    %v262 = vld [vmem:[#allocation10 + $0x50] sm:$0xff]
    %v263 = vld [vmem:[#allocation10 + $0x58] sm:$0xff]
    %v264 = vld [vmem:[#allocation10 + $0x60] sm:$0xff]
    %v265 = vld [vmem:[#allocation10 + $0x68] sm:$0xff]
    %v266 = vld [vmem:[#allocation10 + $0x70] sm:$0xff]
    %v267 = vld [vmem:[#allocation10 + $0x78] sm:$0xff]
    %v268 = vld [vmem:[#allocation10 + $0x80] sm:$0xff]
    %v269 = vld [vmem:[#allocation10 + $0x88] sm:$0xff]
    %v270 = vld [vmem:[#allocation10 + $0x90] sm:$0xff]
    %v271 = vld [vmem:[#allocation10 + $0x98] sm:$0xff]
    %v272 = vld [vmem:[#allocation10 + $0xa0] sm:$0xff]
    %v273 = vld [vmem:[#allocation10 + $0xa8] sm:$0xff]
    %v274 = vld [vmem:[#allocation10 + $0xb0] sm:$0xff]
    %v275 = vld [vmem:[#allocation10 + $0xb8] sm:$0xff]
    %v276 = vld [vmem:[#allocation10 + $0xc0] sm:$0xff]
    %v277 = vld [vmem:[#allocation10 + $0xc8] sm:$0xff]
    %v278 = vld [vmem:[#allocation10 + $0xd0] sm:$0xff]
    %v279 = vld [vmem:[#allocation10 + $0xd8] sm:$0xff]
    %v280 = vld [vmem:[#allocation10 + $0xe0] sm:$0xff]
    %v281 = vld [vmem:[#allocation10 + $0xe8] sm:$0xff]
    %v282 = vld [vmem:[#allocation10 + $0xf0] sm:$0xff]
    %v283 = vld [vmem:[#allocation10 + $0xf8] sm:$0xff]
    %v284 = vld [vmem:[#allocation10 + $0x100] sm:$0xff]
    %v285 = vld [vmem:[#allocation10 + $0x108] sm:$0xff]
    %v286 = vld [vmem:[#allocation10 + $0x110] sm:$0xff]
    %v287 = vld [vmem:[#allocation10 + $0x118] sm:$0xff]
    %v288 = vld [vmem:[#allocation10 + $0x120] sm:$0xff]
    %v289 = vld [vmem:[#allocation10 + $0x128] sm:$0xff]
    %v290 = vld [vmem:[#allocation10 + $0x130] sm:$0xff]
    %v291 = vld [vmem:[#allocation10 + $0x138] sm:$0xff]
    %v292 = vld [vmem:[#allocation10 + $0x140] sm:$0xff]
    %v293 = vld [vmem:[#allocation10 + $0x148] sm:$0xff]
    %v294 = vld [vmem:[#allocation10 + $0x150] sm:$0xff]
    %v295 = vld [vmem:[#allocation10 + $0x158] sm:$0xff]
    %v296 = vld [vmem:[#allocation10 + $0x160] sm:$0xff]
    %v297 = vld [vmem:[#allocation10 + $0x168] sm:$0xff]
    %v298 = vld [vmem:[#allocation10 + $0x170] sm:$0xff]
    %v299 = vld [vmem:[#allocation10 + $0x178] sm:$0xff]
    %v300 = vld [vmem:[#allocation10 + $0x180] sm:$0xff]
    %v301 = vld [vmem:[#allocation10 + $0x188] sm:$0xff]
    %v302 = vld [vmem:[#allocation10 + $0x190] sm:$0xff]
    %v303 = vld [vmem:[#allocation10 + $0x198] sm:$0xff]
    %v304 = vld [vmem:[#allocation10 + $0x1a0] sm:$0xff]
    %v305 = vld [vmem:[#allocation10 + $0x1a8] sm:$0xff]
    %v306 = vld [vmem:[#allocation10 + $0x1b0] sm:$0xff]
    %v307 = vld [vmem:[#allocation10 + $0x1b8] sm:$0xff]
    %v308 = vld [vmem:[#allocation10 + $0x1c0] sm:$0xff]
    %v309 = vld [vmem:[#allocation10 + $0x1c8] sm:$0xff]
    %v310 = vld [vmem:[#allocation10 + $0x1d0] sm:$0xff]
    %v311 = vld [vmem:[#allocation10 + $0x1d8] sm:$0xff]
    %v312 = vld [vmem:[#allocation10 + $0x1e0] sm:$0xff]
    %v313 = vld [vmem:[#allocation10 + $0x1e8] sm:$0xff]
    %v314 = vld [vmem:[#allocation10 + $0x1f0] sm:$0xff]
    %v315 = vld [vmem:[#allocation10 + $0x1f8] sm:$0xff]
    %v316 = vld [vmem:[%s7] sm:$0x3]
    %v318 = vlaneseq
    %v319 = vshrl.u32 %v318, 7
    %v320 = vsub.s32 0, %v319
    %v321 = vrot.slane %v316, %v320
    %v322 = vlaneseq
    %v323 = vshrl.u32 %v322, 7
    %v324 = vsub.s32 1, %v323
    %v325 = vrot.slane %v316, %v324
    %v329 = vcombine.high %v251, %v251
    %331 = vmatprep.subr.mxu0 %v283
    %332 = vmatpush1.msra.mxu0 %v282
    %333 = vmatprep.subr.mxu0 %v281
    %334 = vmatpush1.msra.mxu0 %v280
    %335 = vmatprep.subr.mxu0 %v279
    %336 = vmatpush1.msra.mxu0 %v278
    %337 = vmatprep.subr.mxu0 %v277
    %338 = vmatpush1.msra.mxu0 %v276
    %339 = vmatprep.subr.mxu0 %v275
    %340 = vmatpush1.msra.mxu0 %v274
    %341 = vmatprep.subr.mxu0 %v273
    %342 = vmatpush1.msra.mxu0 %v272
    %343 = vmatprep.subr.mxu0 %v271
    %344 = vmatpush1.msra.mxu0 %v270
    %345 = vmatprep.subr.mxu0 %v269
    %346 = vmatpush1.msra.mxu0 %v268
    %347 = vmatprep.subr.mxu0 %v267
    %348 = vmatpush1.msra.mxu0 %v266
    %349 = vmatprep.subr.mxu0 %v265
    %350 = vmatpush1.msra.mxu0 %v264
    %351 = vmatprep.subr.mxu0 %v263
    %352 = vmatpush1.msra.mxu0 %v262
    %353 = vmatprep.subr.mxu0 %v261
    %354 = vmatpush1.msra.mxu0 %v260
    %355 = vmatprep.subr.mxu0 %v259
    %356 = vmatpush1.msra.mxu0 %v258
    %357 = vmatprep.subr.mxu0 %v257
    %358 = vmatpush1.msra.mxu0 %v256
    %359 = vmatprep.subr.mxu0 %v255
    %360 = vmatpush1.msra.mxu0 %v254
    %361 = vmatprep.subr.mxu0 %v253
    %362 = vmatpush1.msra.mxu0 %v252
    %363 = vmatprep.subr.mxu0 %v315
    %364 = vmatpush2.msra.mxu0 %v314
    %365 = vmatprep.subr.mxu0 %v313
    %366 = vmatpush2.msra.mxu0 %v312
    %367 = vmatprep.subr.mxu0 %v311
    %368 = vmatpush2.msra.mxu0 %v310
    %369 = vmatprep.subr.mxu0 %v309
    %370 = vmatpush2.msra.mxu0 %v308
    %371 = vmatprep.subr.mxu0 %v307
    %372 = vmatpush2.msra.mxu0 %v306
    %373 = vmatprep.subr.mxu0 %v305
    %374 = vmatpush2.msra.mxu0 %v304
    %375 = vmatprep.subr.mxu0 %v303
    %376 = vmatpush2.msra.mxu0 %v302
    %377 = vmatprep.subr.mxu0 %v301
    %378 = vmatpush2.msra.mxu0 %v300
    %379 = vmatprep.subr.mxu0 %v299
    %380 = vmatpush2.msra.mxu0 %v298
    %381 = vmatprep.subr.mxu0 %v297
    %382 = vmatpush2.msra.mxu0 %v296
    %383 = vmatprep.subr.mxu0 %v295
    %384 = vmatpush2.msra.mxu0 %v294
    %385 = vmatprep.subr.mxu0 %v293
    %386 = vmatpush2.msra.mxu0 %v292
    %387 = vmatprep.subr.mxu0 %v291
    %388 = vmatpush2.msra.mxu0 %v290
    %389 = vmatprep.subr.mxu0 %v289
    %390 = vmatpush2.msra.mxu0 %v288
    %391 = vmatprep.subr.mxu0 %v287
    %392 = vmatpush2.msra.mxu0 %v286
    %393 = vmatprep.subr.mxu0 %v285
    %394 = vmatpush2.msra.mxu0 %v284
    %395 = vmatprep.mubr.f32.mxu0 %v329
    %396 = vmatmul.mubr.f32.gmra.mxu0 %v251
    %v397 = vpop.f32.mrf.mxu0
    %v398 = vadd.f32 %v321, %v397
    %v399 = vpop.f32.mrf.mxu0
    %v400 = vadd.f32 %v325, %v399
    %401 = vdwg.mxu0
    %v402 = vmul.f32 %v398, 0.5
    %v403 = vmul.f32 %v400, 0.5
    %v404 = vmul.f32 %v398, 0.70710677
    %v405 = vmul.f32 %v400, 0.70710677
    %v406 = vand.u32 2147483647, %v404
    %v407 = vand.u32 2147483647, %v405
    %v408 = vmul.f32 %v406, 0.3275911
    %v409 = vmul.f32 %v407, 0.3275911
    %v410 = vadd.f32 %v408, 1.0
    %v411 = vadd.f32 %v409, 1.0
    %v412 = vrcp.pop %v410
    %v413 = vmul.f32 1.0, %v412
    %v414 = vrcp.pop %v411
    %v415 = vmul.f32 1.0, %v414
    %v416 = vmul.f32 %v413, 1.0614054
    %v417 = vmul.f32 %v415, 1.0614054
    %v418 = vadd.f32 %v416, -1.4531521
    %v419 = vadd.f32 %v417, -1.4531521
    %v420 = vmul.f32 %v418, %v413
    %v421 = vmul.f32 %v419, %v415
    %v422 = vadd.f32 %v420, 1.4214138
    %v423 = vadd.f32 %v421, 1.4214138
    %v424 = vmul.f32 %v422, %v413
    %v425 = vmul.f32 %v423, %v415
    %v426 = vadd.f32 %v424, -0.28449672
    %v427 = vadd.f32 %v425, -0.28449672
    %v428 = vmul.f32 %v426, %v413
    %v429 = vmul.f32 %v427, %v415
    %v430 = vadd.f32 %v428, 0.2548296
    %v431 = vadd.f32 %v429, 0.2548296
    %v432 = vmul.f32 %v430, %v413
    %v433 = vmul.f32 %v431, %v415
    %v434 = vsub.f32 0.0, %v406
    %v435 = vsub.f32 0.0, %v407
    %v436 = vmul.f32 %v434, %v406
    %v437 = vmul.f32 %v435, %v407
    %v438 = vmul.f32 %v436, 1.442695
    %v439 = vpow.pop %v438
    %v440 = vmul.f32 %v437, 1.442695
    %v441 = vpow.pop %v440
    %v442 = vmul.f32 %v432, %v439
    %v443 = vmul.f32 %v433, %v441
    %v444 = vsub.f32 1.0, %v442
    %v445 = vsub.f32 1.0, %v443
    %vm446 = vcmp.ge.f32.partialorder %v404, 0.0
    %vm447 = vcmp.ge.f32.partialorder %v405, 0.0
    %v448 = vsub.f32 0.0, %v444
    %v449 = vsub.f32 0.0, %v445
    %v450 = vsel %vm446, %v444, %v448
    %v451 = vsel %vm447, %v445, %v449
    %v452 = vadd.f32 %v450, 1.0
    %v453 = vadd.f32 %v451, 1.0
    %v454 = vmul.f32 %v402, %v452
    %v455 = vmul.f32 %v403, %v453
    %v456 = vld [vmem:[#allocation11] sm:$0xff]
    %v457 = vld [vmem:[#allocation11 + $0x8] sm:$0xff]
    %v458 = vld [vmem:[#allocation11 + $0x10] sm:$0xff]
    %v459 = vld [vmem:[#allocation11 + $0x18] sm:$0xff]
    %v460 = vld [vmem:[#allocation11 + $0x20] sm:$0xff]
    %v461 = vld [vmem:[#allocation11 + $0x28] sm:$0xff]
    %v462 = vld [vmem:[#allocation11 + $0x30] sm:$0xff]
    %v463 = vld [vmem:[#allocation11 + $0x38] sm:$0xff]
    %v464 = vld [vmem:[#allocation11 + $0x40] sm:$0xff]
    %v465 = vld [vmem:[#allocation11 + $0x48] sm:$0xff]
    %v466 = vld [vmem:[#allocation11 + $0x50] sm:$0xff]
    %v467 = vld [vmem:[#allocation11 + $0x58] sm:$0xff]
    %v468 = vld [vmem:[#allocation11 + $0x60] sm:$0xff]
    %v469 = vld [vmem:[#allocation11 + $0x68] sm:$0xff]
    %v470 = vld [vmem:[#allocation11 + $0x70] sm:$0xff]
    %v471 = vld [vmem:[#allocation11 + $0x78] sm:$0xff]
    %v472 = vld [vmem:[#allocation11 + $0x80] sm:$0xff]
    %v473 = vld [vmem:[#allocation11 + $0x88] sm:$0xff]
    %v474 = vld [vmem:[#allocation11 + $0x90] sm:$0xff]
    %v475 = vld [vmem:[#allocation11 + $0x98] sm:$0xff]
    %v476 = vld [vmem:[#allocation11 + $0xa0] sm:$0xff]
    %v477 = vld [vmem:[#allocation11 + $0xa8] sm:$0xff]
    %v478 = vld [vmem:[#allocation11 + $0xb0] sm:$0xff]
    %v479 = vld [vmem:[#allocation11 + $0xb8] sm:$0xff]
    %v480 = vld [vmem:[#allocation11 + $0xc0] sm:$0xff]
    %v481 = vld [vmem:[#allocation11 + $0xc8] sm:$0xff]
    %v482 = vld [vmem:[#allocation11 + $0xd0] sm:$0xff]
    %v483 = vld [vmem:[#allocation11 + $0xd8] sm:$0xff]
    %v484 = vld [vmem:[#allocation11 + $0xe0] sm:$0xff]
    %v485 = vld [vmem:[#allocation11 + $0xe8] sm:$0xff]
    %v486 = vld [vmem:[#allocation11 + $0xf0] sm:$0xff]
    %v487 = vld [vmem:[#allocation11 + $0xf8] sm:$0xff]
    %v488 = vld [vmem:[#allocation11 + $0x100] sm:$0xff]
    %v489 = vld [vmem:[#allocation11 + $0x108] sm:$0xff]
    %v490 = vld [vmem:[#allocation11 + $0x110] sm:$0xff]
    %v491 = vld [vmem:[#allocation11 + $0x118] sm:$0xff]
    %v492 = vld [vmem:[#allocation11 + $0x120] sm:$0xff]
    %v493 = vld [vmem:[#allocation11 + $0x128] sm:$0xff]
    %v494 = vld [vmem:[#allocation11 + $0x130] sm:$0xff]
    %v495 = vld [vmem:[#allocation11 + $0x138] sm:$0xff]
    %v496 = vld [vmem:[#allocation11 + $0x140] sm:$0xff]
    %v497 = vld [vmem:[#allocation11 + $0x148] sm:$0xff]
    %v498 = vld [vmem:[#allocation11 + $0x150] sm:$0xff]
    %v499 = vld [vmem:[#allocation11 + $0x158] sm:$0xff]
    %v500 = vld [vmem:[#allocation11 + $0x160] sm:$0xff]
    %v501 = vld [vmem:[#allocation11 + $0x168] sm:$0xff]
    %v502 = vld [vmem:[#allocation11 + $0x170] sm:$0xff]
    %v503 = vld [vmem:[#allocation11 + $0x178] sm:$0xff]
    %v504 = vld [vmem:[#allocation11 + $0x180] sm:$0xff]
    %v505 = vld [vmem:[#allocation11 + $0x188] sm:$0xff]
    %v506 = vld [vmem:[#allocation11 + $0x190] sm:$0xff]
    %v507 = vld [vmem:[#allocation11 + $0x198] sm:$0xff]
    %v508 = vld [vmem:[#allocation11 + $0x1a0] sm:$0xff]
    %v509 = vld [vmem:[#allocation11 + $0x1a8] sm:$0xff]
    %v510 = vld [vmem:[#allocation11 + $0x1b0] sm:$0xff]
    %v511 = vld [vmem:[#allocation11 + $0x1b8] sm:$0xff]
    %v512 = vld [vmem:[#allocation11 + $0x1c0] sm:$0xff]
    %v513 = vld [vmem:[#allocation11 + $0x1c8] sm:$0xff]
    %v514 = vld [vmem:[#allocation11 + $0x1d0] sm:$0xff]
    %v515 = vld [vmem:[#allocation11 + $0x1d8] sm:$0xff]
    %v516 = vld [vmem:[#allocation11 + $0x1e0] sm:$0xff]
    %v517 = vld [vmem:[#allocation11 + $0x1e8] sm:$0xff]
    %v518 = vld [vmem:[#allocation11 + $0x1f0] sm:$0xff]
    %v519 = vld [vmem:[#allocation11 + $0x1f8] sm:$0xff]
    %v520 = vld [vmem:[%s9] sm:$0x3]
    %v522 = vlaneseq
    %v523 = vshrl.u32 %v522, 7
    %v524 = vsub.s32 0, %v523
    %v525 = vrot.slane %v520, %v524
    %v526 = vlaneseq
    %v527 = vshrl.u32 %v526, 7
    %v528 = vsub.s32 1, %v527
    %v529 = vrot.slane %v520, %v528
    %532 = vmatprep.subr.mxu0 %v487
    %533 = vmatpush1.msra.mxu0 %v486
    %534 = vmatprep.subr.mxu0 %v485
    %535 = vmatpush1.msra.mxu0 %v484
    %536 = vmatprep.subr.mxu0 %v483
    %537 = vmatpush1.msra.mxu0 %v482
    %538 = vmatprep.subr.mxu0 %v481
    %539 = vmatpush1.msra.mxu0 %v480
    %540 = vmatprep.subr.mxu0 %v479
    %541 = vmatpush1.msra.mxu0 %v478
    %542 = vmatprep.subr.mxu0 %v477
    %543 = vmatpush1.msra.mxu0 %v476
    %544 = vmatprep.subr.mxu0 %v475
    %545 = vmatpush1.msra.mxu0 %v474
    %546 = vmatprep.subr.mxu0 %v473
    %547 = vmatpush1.msra.mxu0 %v472
    %548 = vmatprep.subr.mxu0 %v471
    %549 = vmatpush1.msra.mxu0 %v470
    %550 = vmatprep.subr.mxu0 %v469
    %551 = vmatpush1.msra.mxu0 %v468
    %552 = vmatprep.subr.mxu0 %v467
    %553 = vmatpush1.msra.mxu0 %v466
    %554 = vmatprep.subr.mxu0 %v465
    %555 = vmatpush1.msra.mxu0 %v464
    %556 = vmatprep.subr.mxu0 %v463
    %557 = vmatpush1.msra.mxu0 %v462
    %558 = vmatprep.subr.mxu0 %v461
    %559 = vmatpush1.msra.mxu0 %v460
    %560 = vmatprep.subr.mxu0 %v459
    %561 = vmatpush1.msra.mxu0 %v458
    %562 = vmatprep.subr.mxu0 %v457
    %563 = vmatpush1.msra.mxu0 %v456
    %564 = vmatprep.subr.mxu0 %v519
    %565 = vmatpush2.msra.mxu0 %v518
    %566 = vmatprep.subr.mxu0 %v517
    %567 = vmatpush2.msra.mxu0 %v516
    %568 = vmatprep.subr.mxu0 %v515
    %569 = vmatpush2.msra.mxu0 %v514
    %570 = vmatprep.subr.mxu0 %v513
    %571 = vmatpush2.msra.mxu0 %v512
    %572 = vmatprep.subr.mxu0 %v511
    %573 = vmatpush2.msra.mxu0 %v510
    %574 = vmatprep.subr.mxu0 %v509
    %575 = vmatpush2.msra.mxu0 %v508
    %576 = vmatprep.subr.mxu0 %v507
    %577 = vmatpush2.msra.mxu0 %v506
    %578 = vmatprep.subr.mxu0 %v505
    %579 = vmatpush2.msra.mxu0 %v504
    %580 = vmatprep.subr.mxu0 %v503
    %581 = vmatpush2.msra.mxu0 %v502
    %582 = vmatprep.subr.mxu0 %v501
    %583 = vmatpush2.msra.mxu0 %v500
    %584 = vmatprep.subr.mxu0 %v499
    %585 = vmatpush2.msra.mxu0 %v498
    %586 = vmatprep.subr.mxu0 %v497
    %587 = vmatpush2.msra.mxu0 %v496
    %588 = vmatprep.subr.mxu0 %v495
    %589 = vmatpush2.msra.mxu0 %v494
    %590 = vmatprep.subr.mxu0 %v493
    %591 = vmatpush2.msra.mxu0 %v492
    %592 = vmatprep.subr.mxu0 %v491
    %593 = vmatpush2.msra.mxu0 %v490
    %594 = vmatprep.subr.mxu0 %v489
    %595 = vmatpush2.msra.mxu0 %v488
    %596 = vmatprep.mubr.f32.mxu0 %v455
    %597 = vmatmul.mubr.f32.gmra.mxu0 %v454
    %v598 = vpop.f32.mrf.mxu0
    %v599 = vadd.f32 %v525, %v598
    %v600 = vpop.f32.mrf.mxu0
    %v601 = vadd.f32 %v529, %v600
    %602 = vdwg.mxu0
    %v603 = vmul.f32 %v599, 0.5
    %v604 = vmul.f32 %v601, 0.5
    %v605 = vmul.f32 %v599, 0.70710677
    %v606 = vmul.f32 %v601, 0.70710677
    %v607 = vand.u32 2147483647, %v605
    %v608 = vand.u32 2147483647, %v606
    %v609 = vmul.f32 %v607, 0.3275911
    %v610 = vmul.f32 %v608, 0.3275911
    %v611 = vadd.f32 %v609, 1.0
    %v612 = vadd.f32 %v610, 1.0
    %v613 = vrcp.pop %v611
    %v614 = vmul.f32 1.0, %v613
    %v615 = vrcp.pop %v612
    %v616 = vmul.f32 1.0, %v615
    %v617 = vmul.f32 %v614, 1.0614054
    %v618 = vmul.f32 %v616, 1.0614054
    %v619 = vadd.f32 %v617, -1.4531521
    %v620 = vadd.f32 %v618, -1.4531521
    %v621 = vmul.f32 %v619, %v614
    %v622 = vmul.f32 %v620, %v616
    %v623 = vadd.f32 %v621, 1.4214138
    %v624 = vadd.f32 %v622, 1.4214138
    %v625 = vmul.f32 %v623, %v614
    %v626 = vmul.f32 %v624, %v616
    %v627 = vadd.f32 %v625, -0.28449672
    %v628 = vadd.f32 %v626, -0.28449672
    %v629 = vmul.f32 %v627, %v614
    %v630 = vmul.f32 %v628, %v616
    %v631 = vadd.f32 %v629, 0.2548296
    %v632 = vadd.f32 %v630, 0.2548296
    %v633 = vmul.f32 %v631, %v614
    %v634 = vmul.f32 %v632, %v616
    %v635 = vsub.f32 0.0, %v607
    %v636 = vsub.f32 0.0, %v608
    %v637 = vmul.f32 %v635, %v607
    %v638 = vmul.f32 %v636, %v608
    %v639 = vmul.f32 %v637, 1.442695
    %v640 = vpow.pop %v639
    %v641 = vmul.f32 %v638, 1.442695
    %v642 = vpow.pop %v641
    %v643 = vmul.f32 %v633, %v640
    %v644 = vmul.f32 %v634, %v642
    %v645 = vsub.f32 1.0, %v643
    %v646 = vsub.f32 1.0, %v644
    %vm647 = vcmp.ge.f32.partialorder %v605, 0.0
    %vm648 = vcmp.ge.f32.partialorder %v606, 0.0
    %v649 = vsub.f32 0.0, %v645
    %v650 = vsub.f32 0.0, %v646
    %v651 = vsel %vm647, %v645, %v649
    %v652 = vsel %vm648, %v646, %v650
    %v653 = vadd.f32 %v651, 1.0
    %v654 = vadd.f32 %v652, 1.0
    %v655 = vmul.f32 %v603, %v653
    %v656 = vmul.f32 %v604, %v654
    %v657 = vld [vmem:[#allocation13] sm:$0xff]
    %v658 = vld [vmem:[#allocation13 + $0x8] sm:$0xff]
    %v659 = vld [vmem:[#allocation13 + $0x10] sm:$0xff]
    %v660 = vld [vmem:[#allocation13 + $0x18] sm:$0xff]
    %v661 = vld [vmem:[#allocation13 + $0x20] sm:$0xff]
    %v662 = vld [vmem:[#allocation13 + $0x28] sm:$0xff]
    %v663 = vld [vmem:[#allocation13 + $0x30] sm:$0xff]
    %v664 = vld [vmem:[#allocation13 + $0x38] sm:$0xff]
    %v665 = vld [vmem:[#allocation13 + $0x40] sm:$0xff]
    %v666 = vld [vmem:[#allocation13 + $0x48] sm:$0xff]
    %v667 = vld [vmem:[#allocation13 + $0x50] sm:$0xff]
    %v668 = vld [vmem:[#allocation13 + $0x58] sm:$0xff]
    %v669 = vld [vmem:[#allocation13 + $0x60] sm:$0xff]
    %v670 = vld [vmem:[#allocation13 + $0x68] sm:$0xff]
    %v671 = vld [vmem:[#allocation13 + $0x70] sm:$0xff]
    %v672 = vld [vmem:[#allocation13 + $0x78] sm:$0xff]
    %v673 = vld [vmem:[#allocation13 + $0x80] sm:$0xff]
    %v674 = vld [vmem:[#allocation13 + $0x88] sm:$0xff]
    %v675 = vld [vmem:[#allocation13 + $0x90] sm:$0xff]
    %v676 = vld [vmem:[#allocation13 + $0x98] sm:$0xff]
    %v677 = vld [vmem:[#allocation13 + $0xa0] sm:$0xff]
    %v678 = vld [vmem:[#allocation13 + $0xa8] sm:$0xff]
    %v679 = vld [vmem:[#allocation13 + $0xb0] sm:$0xff]
    %v680 = vld [vmem:[#allocation13 + $0xb8] sm:$0xff]
    %v681 = vld [vmem:[#allocation13 + $0xc0] sm:$0xff]
    %v682 = vld [vmem:[#allocation13 + $0xc8] sm:$0xff]
    %v683 = vld [vmem:[#allocation13 + $0xd0] sm:$0xff]
    %v684 = vld [vmem:[#allocation13 + $0xd8] sm:$0xff]
    %v685 = vld [vmem:[#allocation13 + $0xe0] sm:$0xff]
    %v686 = vld [vmem:[#allocation13 + $0xe8] sm:$0xff]
    %v687 = vld [vmem:[#allocation13 + $0xf0] sm:$0xff]
    %v688 = vld [vmem:[#allocation13 + $0xf8] sm:$0xff]
    %v689 = vld [vmem:[#allocation13 + $0x100] sm:$0xff]
    %v690 = vld [vmem:[#allocation13 + $0x108] sm:$0xff]
    %v691 = vld [vmem:[#allocation13 + $0x110] sm:$0xff]
    %v692 = vld [vmem:[#allocation13 + $0x118] sm:$0xff]
    %v693 = vld [vmem:[#allocation13 + $0x120] sm:$0xff]
    %v694 = vld [vmem:[#allocation13 + $0x128] sm:$0xff]
    %v695 = vld [vmem:[#allocation13 + $0x130] sm:$0xff]
    %v696 = vld [vmem:[#allocation13 + $0x138] sm:$0xff]
    %v697 = vld [vmem:[#allocation13 + $0x140] sm:$0xff]
    %v698 = vld [vmem:[#allocation13 + $0x148] sm:$0xff]
    %v699 = vld [vmem:[#allocation13 + $0x150] sm:$0xff]
    %v700 = vld [vmem:[#allocation13 + $0x158] sm:$0xff]
    %v701 = vld [vmem:[#allocation13 + $0x160] sm:$0xff]
    %v702 = vld [vmem:[#allocation13 + $0x168] sm:$0xff]
    %v703 = vld [vmem:[#allocation13 + $0x170] sm:$0xff]
    %v704 = vld [vmem:[#allocation13 + $0x178] sm:$0xff]
    %v705 = vld [vmem:[#allocation13 + $0x180] sm:$0xff]
    %v706 = vld [vmem:[#allocation13 + $0x188] sm:$0xff]
    %v707 = vld [vmem:[#allocation13 + $0x190] sm:$0xff]
    %v708 = vld [vmem:[#allocation13 + $0x198] sm:$0xff]
    %v709 = vld [vmem:[#allocation13 + $0x1a0] sm:$0xff]
    %v710 = vld [vmem:[#allocation13 + $0x1a8] sm:$0xff]
    %v711 = vld [vmem:[#allocation13 + $0x1b0] sm:$0xff]
    %v712 = vld [vmem:[#allocation13 + $0x1b8] sm:$0xff]
    %v713 = vld [vmem:[#allocation13 + $0x1c0] sm:$0xff]
    %v714 = vld [vmem:[#allocation13 + $0x1c8] sm:$0xff]
    %v715 = vld [vmem:[#allocation13 + $0x1d0] sm:$0xff]
    %v716 = vld [vmem:[#allocation13 + $0x1d8] sm:$0xff]
    %v717 = vld [vmem:[#allocation13 + $0x1e0] sm:$0xff]
    %v718 = vld [vmem:[#allocation13 + $0x1e8] sm:$0xff]
    %v719 = vld [vmem:[#allocation13 + $0x1f0] sm:$0xff]
    %v720 = vld [vmem:[#allocation13 + $0x1f8] sm:$0xff]
    %v721 = vld [vmem:[%s11] sm:$0x3]
    %v723 = vlaneseq
    %v724 = vshrl.u32 %v723, 7
    %v725 = vsub.s32 0, %v724
    %v726 = vrot.slane %v721, %v725
    %v727 = vlaneseq
    %v728 = vshrl.u32 %v727, 7
    %v729 = vsub.s32 1, %v728
    %v730 = vrot.slane %v721, %v729
    %733 = vmatprep.subr.mxu0 %v688
    %734 = vmatpush1.msra.mxu0 %v687
    %735 = vmatprep.subr.mxu0 %v686
    %736 = vmatpush1.msra.mxu0 %v685
    %737 = vmatprep.subr.mxu0 %v684
    %738 = vmatpush1.msra.mxu0 %v683
    %739 = vmatprep.subr.mxu0 %v682
    %740 = vmatpush1.msra.mxu0 %v681
    %741 = vmatprep.subr.mxu0 %v680
    %742 = vmatpush1.msra.mxu0 %v679
    %743 = vmatprep.subr.mxu0 %v678
    %744 = vmatpush1.msra.mxu0 %v677
    %745 = vmatprep.subr.mxu0 %v676
    %746 = vmatpush1.msra.mxu0 %v675
    %747 = vmatprep.subr.mxu0 %v674
    %748 = vmatpush1.msra.mxu0 %v673
    %749 = vmatprep.subr.mxu0 %v672
    %750 = vmatpush1.msra.mxu0 %v671
    %751 = vmatprep.subr.mxu0 %v670
    %752 = vmatpush1.msra.mxu0 %v669
    %753 = vmatprep.subr.mxu0 %v668
    %754 = vmatpush1.msra.mxu0 %v667
    %755 = vmatprep.subr.mxu0 %v666
    %756 = vmatpush1.msra.mxu0 %v665
    %757 = vmatprep.subr.mxu0 %v664
    %758 = vmatpush1.msra.mxu0 %v663
    %759 = vmatprep.subr.mxu0 %v662
    %760 = vmatpush1.msra.mxu0 %v661
    %761 = vmatprep.subr.mxu0 %v660
    %762 = vmatpush1.msra.mxu0 %v659
    %763 = vmatprep.subr.mxu0 %v658
    %764 = vmatpush1.msra.mxu0 %v657
    %765 = vmatprep.subr.mxu0 %v720
    %766 = vmatpush2.msra.mxu0 %v719
    %767 = vmatprep.subr.mxu0 %v718
    %768 = vmatpush2.msra.mxu0 %v717
    %769 = vmatprep.subr.mxu0 %v716
    %770 = vmatpush2.msra.mxu0 %v715
    %771 = vmatprep.subr.mxu0 %v714
    %772 = vmatpush2.msra.mxu0 %v713
    %773 = vmatprep.subr.mxu0 %v712
    %774 = vmatpush2.msra.mxu0 %v711
    %775 = vmatprep.subr.mxu0 %v710
    %776 = vmatpush2.msra.mxu0 %v709
    %777 = vmatprep.subr.mxu0 %v708
    %778 = vmatpush2.msra.mxu0 %v707
    %779 = vmatprep.subr.mxu0 %v706
    %780 = vmatpush2.msra.mxu0 %v705
    %781 = vmatprep.subr.mxu0 %v704
    %782 = vmatpush2.msra.mxu0 %v703
    %783 = vmatprep.subr.mxu0 %v702
    %784 = vmatpush2.msra.mxu0 %v701
    %785 = vmatprep.subr.mxu0 %v700
    %786 = vmatpush2.msra.mxu0 %v699
    %787 = vmatprep.subr.mxu0 %v698
    %788 = vmatpush2.msra.mxu0 %v697
    %789 = vmatprep.subr.mxu0 %v696
    %790 = vmatpush2.msra.mxu0 %v695
    %791 = vmatprep.subr.mxu0 %v694
    %792 = vmatpush2.msra.mxu0 %v693
    %793 = vmatprep.subr.mxu0 %v692
    %794 = vmatpush2.msra.mxu0 %v691
    %795 = vmatprep.subr.mxu0 %v690
    %796 = vmatpush2.msra.mxu0 %v689
    %797 = vmatprep.mubr.f32.mxu0 %v656
    %798 = vmatmul.mubr.f32.gmra.mxu0 %v655
    %v799 = vpop.f32.mrf.mxu0
    %v800 = vadd.f32 %v726, %v799
    %v801 = vpop.f32.mrf.mxu0
    %v802 = vadd.f32 %v730, %v801
    %803 = vdwg.mxu0
    %804 = vst [vmem:[#allocation14] sm:$0xf] %v222
    %v807 = vcombine.low %v800, %v802
    %809 = vst [vmem:[#allocation14 + $0x4] sm:$0xff] %v807
    // Predicated region
    $region78: #{tpu_custom_call.1} parent=1 // pred_check
      _
    $region79: #{tpu_custom_call.1} parent=1 // pred_check_branch
      %811 = sbr.rel (0) target = $region81
    $region80: #{tpu_custom_call.1} parent=1 // pred_region
      %s813 = ssub.s32 192, 192
      %814 = vsyncadd [#allocation4], %s813
      %s816 = sshll.u32 [#allocation14], 4
      %s817 = int_to_ptr.vmem [resolvable:$true] %s816
      %819 = dma.vmem_to_hbm [thread:$0]  %s817, 192, %s12, [#allocation4]
    $region81: #{tpu_custom_call.1} parent=1 // pred_fallthru
      _
    // Predicated region
    $region82: #{tpu_custom_call.1} parent=1 // pred_check
      _
    $region83: #{tpu_custom_call.1} parent=1 // pred_check_branch
      %821 = sbr.rel (0) target = $region85
    $region84: #{tpu_custom_call.1} parent=1 // pred_region
      %822 = dma.done [#allocation4], 192
    $region85: #{tpu_custom_call.1} parent=1 // pred_fallthru
      _
    %823 = vsyncpa [#allocation3], 1
    %824 = vsyncpa [#allocation6], 1
    %825 = vsyncpa [#allocation9], 1
    %826 = vsyncpa [#allocation12], 1
    %827 = vsyncpa [#allocation4], 1

// kernel: tpu_custom_call.1
$region0: #{tpu_custom_call.1}
  #allocation0 [shape = 'u32[]', space=smem, size = 0x4, offset = 0x4, fixed_abs, tag = 'smem constant byte address 0x4 - core index']
  #allocation1 [shape = 'u32[144,128]{1,0:T(1,128)}', space=vmem, size = 0x12000, scoped, tag = 'internal scratch']
  %s0 = inlined_call_operand.hbm [shape: f32[4,128], index: 0, kind: input, shape index: {}]
  %s1 = inlined_call_operand.hbm [shape: f32[4,256], index: 1, kind: input, shape index: {}]
  %s2 = inlined_call_operand.hbm [shape: f32[128,128], index: 2, kind: input, shape index: {}]
  %s3 = inlined_call_operand.hbm [shape: f32[1,128], index: 3, kind: input, shape index: {}]
  %s4 = inlined_call_operand.vmem [shape: f32[1,256], index: 4, kind: input, shape index: {}]
  %s5 = inlined_call_operand.vmem [shape: f32[1,256], index: 5, kind: input, shape index: {}]
  %s6 = inlined_call_operand.hbm [shape: f32[256,256], index: 6, kind: input, shape index: {}]
  %s7 = inlined_call_operand.vmem [shape: f32[1,256], index: 7, kind: input, shape index: {}]
  %s8 = inlined_call_operand.hbm [shape: f32[256,256], index: 8, kind: input, shape index: {}]
  %s9 = inlined_call_operand.vmem [shape: f32[1,256], index: 9, kind: input, shape index: {}]
  %s10 = inlined_call_operand.hbm [shape: f32[256,256], index: 10, kind: input, shape index: {}]
  %s11 = inlined_call_operand.vmem [shape: f32[1,256], index: 11, kind: input, shape index: {}]
  %s12 = inlined_call_operand.hbm [shape: f32[4,384], index: 12, kind: output, shape index: {}]
  %s13 = sld [smem:[#allocation0]]
  $region86: #{tpu_custom_call.1} parent=0
    _
  %s15 = ssub.s32 1, %s13
  %s16 = scalar_select 0, %s15, %s13
  $region1: #{tpu_custom_call.1} parent=0
    #allocation2 [shape = 'u8[2048]{0}', space=vmem, size = 0x800, scoped, tag = 'input window, operand 0, single buffered']
    #allocation3 [shape = 's32[1]{0}', space=sflag, size = 0x4, scoped, tag = 'scoped memory for tpu_custom_call.1']
    #allocation4 [shape = 's32[1]{0}', space=sflag, size = 0x4, scoped, tag = 'scoped memory for tpu_custom_call.1']
    #allocation5 [shape = 'u8[4096]{0}', space=vmem, size = 0x1000, scoped, tag = 'input window, operand 1, single buffered']
    #allocation6 [shape = 's32[1]{0}', space=sflag, size = 0x4, scoped, tag = 'scoped memory for tpu_custom_call.1']
    #allocation7 [shape = 'u8[65536]{0}', space=vmem, size = 0x10000, scoped, tag = 'input window, operand 2, single buffered']
    #allocation8 [shape = 'u8[512]{0}', space=vmem, size = 0x400, scoped, tag = 'input window, operand 3, single buffered']
    #allocation9 [shape = 's32[1]{0}', space=sflag, size = 0x4, scoped, tag = 'scoped memory for tpu_custom_call.1']
    #allocation10 [shape = 'u8[262144]{0}', space=vmem, size = 0x40000, scoped, tag = 'input window, operand 6, single buffered']
    #allocation11 [shape = 'u8[262144]{0}', space=vmem, size = 0x40000, scoped, tag = 'input window, operand 8, single buffered']
    #allocation12 [shape = 's32[1]{0}', space=sflag, size = 0x4, scoped, tag = 'scoped memory for tpu_custom_call.1']
    #allocation13 [shape = 'u8[262144]{0}', space=vmem, size = 0x40000, scoped, tag = 'input window, operand 10, single buffered']
    #allocation14 [shape = 'u8[6144]{0}', space=vmem, size = 0x1800, scoped, tag = 'output window, operand 0, single buffered']
    %17 = vsyncpa [#allocation3], 0
    %18 = vsyncpa [#allocation6], 0
    %19 = vsyncpa [#allocation9], 0
    %20 = vsyncpa [#allocation12], 0
    %21 = vsyncpa [#allocation4], 0
    // Predicated region
    $region2: #{tpu_custom_call.1} parent=1 // pred_check
      _
    $region3: #{tpu_custom_call.1} parent=1 // pred_check_branch
      %23 = sbr.rel (0) target = $region5
    $region4: #{tpu_custom_call.1} parent=1 // pred_region
      %s25 = ssub.s32 64, 64
      %26 = vsyncadd [#allocation3], %s25
      %s28 = sshll.u32 [#allocation2], 4
      %s29 = int_to_ptr.vmem [resolvable:$true] %s28
      %31 = dma.hbm_to_vmem [thread:$0]  %s0, 64, %s29, [#allocation3]
    $region5: #{tpu_custom_call.1} parent=1 // pred_fallthru
      _
    // Predicated region
    $region6: #{tpu_custom_call.1} parent=1 // pred_check
      _
    $region7: #{tpu_custom_call.1} parent=1 // pred_check_branch
      %33 = sbr.rel (0) target = $region9
    $region8: #{tpu_custom_call.1} parent=1 // pred_region
      %s35 = ssub.s32 128, 128
      %36 = vsyncadd [#allocation6], %s35
      %s38 = sshll.u32 [#allocation5], 4
      %s39 = int_to_ptr.vmem [resolvable:$true] %s38
      %41 = dma.hbm_to_vmem [thread:$0]  %s1, 128, %s39, [#allocation6]
    $region9: #{tpu_custom_call.1} parent=1 // pred_fallthru
      _
    // Predicated region
    $region10: #{tpu_custom_call.1} parent=1 // pred_check
      _
    $region11: #{tpu_custom_call.1} parent=1 // pred_check_branch
      %43 = sbr.rel (0) target = $region13
    $region12: #{tpu_custom_call.1} parent=1 // pred_region
      %s45 = ssub.s32 2048, 2048
      %46 = vsyncadd [#allocation6], %s45
      %s47 = sshll.u32 [#allocation7], 4
      %s48 = int_to_ptr.vmem [resolvable:$true] %s47
      %53 = dma.hbm_to_vmem [thread:$0]  %s2, 2048, %s48, [#allocation6], 128, 128, 8
    $region13: #{tpu_custom_call.1} parent=1 // pred_fallthru
      _
    // Predicated region
    $region14: #{tpu_custom_call.1} parent=1 // pred_check
      _
    $region15: #{tpu_custom_call.1} parent=1 // pred_check_branch
      %55 = sbr.rel (0) target = $region17
    $region16: #{tpu_custom_call.1} parent=1 // pred_region
      %s57 = ssub.s32 16, 16
      %58 = vsyncadd [#allocation9], %s57
      %s60 = sshll.u32 [#allocation8], 4
      %s61 = int_to_ptr.vmem [resolvable:$true] %s60
      %63 = dma.hbm_to_vmem [thread:$0]  %s3, 16, %s61, [#allocation9]
    $region17: #{tpu_custom_call.1} parent=1 // pred_fallthru
      _
    // Predicated region
    $region18: #{tpu_custom_call.1} parent=1 // pred_check
      _
    $region19: #{tpu_custom_call.1} parent=1 // pred_check_branch
      %65 = sbr.rel (0) target = $region21
    $region20: #{tpu_custom_call.1} parent=1 // pred_region
      _
    $region21: #{tpu_custom_call.1} parent=1 // pred_fallthru
      _
    // Predicated region
    $region22: #{tpu_custom_call.1} parent=1 // pred_check
      _
    $region23: #{tpu_custom_call.1} parent=1 // pred_check_branch
      %67 = sbr.rel (0) target = $region25
    $region24: #{tpu_custom_call.1} parent=1 // pred_region
      _
    $region25: #{tpu_custom_call.1} parent=1 // pred_fallthru
      _
    // Predicated region
    $region26: #{tpu_custom_call.1} parent=1 // pred_check
      _
    $region27: #{tpu_custom_call.1} parent=1 // pred_check_branch
      %69 = sbr.rel (0) target = $region29
    $region28: #{tpu_custom_call.1} parent=1 // pred_region
      %s71 = ssub.s32 8192, 8192
      %72 = vsyncadd [#allocation9], %s71
      %s73 = sshll.u32 [#allocation10], 4
      %s74 = int_to_ptr.vmem [resolvable:$true] %s73
      %79 = dma.hbm_to_vmem [thread:$0]  %s6, 8192, %s74, [#allocation9], 256, 256, 16
    $region29: #{tpu_custom_call.1} parent=1 // pred_fallthru
      _
    // Predicated region
    $region30: #{tpu_custom_call.1} parent=1 // pred_check
      _
    $region31: #{tpu_custom_call.1} parent=1 // pred_check_branch
      %81 = sbr.rel (0) target = $region33
    $region32: #{tpu_custom_call.1} parent=1 // pred_region
      _
    $region33: #{tpu_custom_call.1} parent=1 // pred_fallthru
      _
    // Predicated region
    $region34: #{tpu_custom_call.1} parent=1 // pred_check
      _
    $region35: #{tpu_custom_call.1} parent=1 // pred_check_branch
      %83 = sbr.rel (0) target = $region37
    $region36: #{tpu_custom_call.1} parent=1 // pred_region
      %s85 = ssub.s32 8192, 8192
      %86 = vsyncadd [#allocation12], %s85
      %s87 = sshll.u32 [#allocation11], 4
      %s88 = int_to_ptr.vmem [resolvable:$true] %s87
      %93 = dma.hbm_to_vmem [thread:$0]  %s8, 8192, %s88, [#allocation12], 256, 256, 16
    $region37: #{tpu_custom_call.1} parent=1 // pred_fallthru
      _
    // Predicated region
    $region38: #{tpu_custom_call.1} parent=1 // pred_check
      _
    $region39: #{tpu_custom_call.1} parent=1 // pred_check_branch
      %95 = sbr.rel (0) target = $region41
    $region40: #{tpu_custom_call.1} parent=1 // pred_region
      _
    $region41: #{tpu_custom_call.1} parent=1 // pred_fallthru
      _
    // Predicated region
    $region42: #{tpu_custom_call.1} parent=1 // pred_check
      _
    $region43: #{tpu_custom_call.1} parent=1 // pred_check_branch
      %97 = sbr.rel (0) target = $region45
    $region44: #{tpu_custom_call.1} parent=1 // pred_region
      %s99 = ssub.s32 8192, 8192
      %100 = vsyncadd [#allocation12], %s99
      %s101 = sshll.u32 [#allocation13], 4
      %s102 = int_to_ptr.vmem [resolvable:$true] %s101
      %107 = dma.hbm_to_vmem [thread:$0]  %s10, 8192, %s102, [#allocation12], 256, 256, 16
    $region45: #{tpu_custom_call.1} parent=1 // pred_fallthru
      _
    // Predicated region
    $region46: #{tpu_custom_call.1} parent=1 // pred_check
      _
    $region47: #{tpu_custom_call.1} parent=1 // pred_check_branch
      %109 = sbr.rel (0) target = $region49
    $region48: #{tpu_custom_call.1} parent=1 // pred_region
      _
    $region49: #{tpu_custom_call.1} parent=1 // pred_fallthru
      _
    // Predicated region
    $region50: #{tpu_custom_call.1} parent=1 // pred_check
      _
    $region51: #{tpu_custom_call.1} parent=1 // pred_check_branch
      %111 = sbr.rel (0) target = $region53
    $region52: #{tpu_custom_call.1} parent=1 // pred_region
      %112 = dma.done [#allocation3], 64
    $region53: #{tpu_custom_call.1} parent=1 // pred_fallthru
      _
    // Predicated region
    $region54: #{tpu_custom_call.1} parent=1 // pred_check
      _
    $region55: #{tpu_custom_call.1} parent=1 // pred_check_branch
      %114 = sbr.rel (0) target = $region57
    $region56: #{tpu_custom_call.1} parent=1 // pred_region
      %115 = dma.done [#allocation6], 128
    $region57: #{tpu_custom_call.1} parent=1 // pred_fallthru
      _
    // Predicated region
    $region58: #{tpu_custom_call.1} parent=1 // pred_check
      _
    $region59: #{tpu_custom_call.1} parent=1 // pred_check_branch
      %117 = sbr.rel (0) target = $region61
    $region60: #{tpu_custom_call.1} parent=1 // pred_region
      %118 = dma.done [#allocation6], 2048
    $region61: #{tpu_custom_call.1} parent=1 // pred_fallthru
      _
    // Predicated region
    $region62: #{tpu_custom_call.1} parent=1 // pred_check
      _
    $region63: #{tpu_custom_call.1} parent=1 // pred_check_branch
      %120 = sbr.rel (0) target = $region65
    $region64: #{tpu_custom_call.1} parent=1 // pred_region
      %121 = dma.done [#allocation9], 16
    $region65: #{tpu_custom_call.1} parent=1 // pred_fallthru
      _
    // Predicated region
    $region66: #{tpu_custom_call.1} parent=1 // pred_check
      _
    $region67: #{tpu_custom_call.1} parent=1 // pred_check_branch
      %123 = sbr.rel (0) target = $region69
    $region68: #{tpu_custom_call.1} parent=1 // pred_region
      %124 = dma.done [#allocation9], 8192
    $region69: #{tpu_custom_call.1} parent=1 // pred_fallthru
      _
    // Predicated region
    $region70: #{tpu_custom_call.1} parent=1 // pred_check
      _
    $region71: #{tpu_custom_call.1} parent=1 // pred_check_branch
      %126 = sbr.rel (0) target = $region73
    $region72: #{tpu_custom_call.1} parent=1 // pred_region
      %127 = dma.done [#allocation12], 8192
    $region73: #{tpu_custom_call.1} parent=1 // pred_fallthru
      _
    // Predicated region
    $region74: #{tpu_custom_call.1} parent=1 // pred_check
      _
    $region75: #{tpu_custom_call.1} parent=1 // pred_check_branch
      %129 = sbr.rel (0) target = $region77
    $region76: #{tpu_custom_call.1} parent=1 // pred_region
      %130 = dma.done [#allocation12], 8192
    $region77: #{tpu_custom_call.1} parent=1 // pred_fallthru
      _
    %v131 = vld [vmem:[#allocation2] sm:$0xf]
    %v132 = vld [vmem:[#allocation7] sm:$0xff]
    %v133 = vld [vmem:[#allocation7 + $0x8] sm:$0xff]
    %v134 = vld [vmem:[#allocation7 + $0x10] sm:$0xff]
    %v135 = vld [vmem:[#allocation7 + $0x18] sm:$0xff]
    %v136 = vld [vmem:[#allocation7 + $0x20] sm:$0xff]
    %v137 = vld [vmem:[#allocation7 + $0x28] sm:$0xff]
    %v138 = vld [vmem:[#allocation7 + $0x30] sm:$0xff]
    %v139 = vld [vmem:[#allocation7 + $0x38] sm:$0xff]
    %v140 = vld [vmem:[#allocation7 + $0x40] sm:$0xff]
    %v141 = vld [vmem:[#allocation7 + $0x48] sm:$0xff]
    %v142 = vld [vmem:[#allocation7 + $0x50] sm:$0xff]
    %v143 = vld [vmem:[#allocation7 + $0x58] sm:$0xff]
    %v144 = vld [vmem:[#allocation7 + $0x60] sm:$0xff]
    %v145 = vld [vmem:[#allocation7 + $0x68] sm:$0xff]
    %v146 = vld [vmem:[#allocation7 + $0x70] sm:$0xff]
    %v147 = vld [vmem:[#allocation7 + $0x78] sm:$0xff]
    %v148 = vld [vmem:[#allocation8] sm:$0x1]
    %v150 = vlaneseq
    %v151 = vshrl.u32 %v150, 7
    %v152 = vsub.s32 0, %v151
    %v153 = vrot.slane %v148, %v152
    %155 = vmatprep.subr.mxu0 0.0
    %156 = vmatpush1.msra.mxu0 %v147
    %157 = vmatprep.subr.mxu0 0.0
    %158 = vmatpush1.msra.mxu0 %v146
    %159 = vmatprep.subr.mxu0 0.0
    %160 = vmatpush1.msra.mxu0 %v145
    %161 = vmatprep.subr.mxu0 0.0
    %162 = vmatpush1.msra.mxu0 %v144
    %163 = vmatprep.subr.mxu0 0.0
    %164 = vmatpush1.msra.mxu0 %v143
    %165 = vmatprep.subr.mxu0 0.0
    %166 = vmatpush1.msra.mxu0 %v142
    %167 = vmatprep.subr.mxu0 0.0
    %168 = vmatpush1.msra.mxu0 %v141
    %169 = vmatprep.subr.mxu0 0.0
    %170 = vmatpush1.msra.mxu0 %v140
    %171 = vmatprep.subr.mxu0 0.0
    %172 = vmatpush1.msra.mxu0 %v139
    %173 = vmatprep.subr.mxu0 0.0
    %174 = vmatpush1.msra.mxu0 %v138
    %175 = vmatprep.subr.mxu0 0.0
    %176 = vmatpush1.msra.mxu0 %v137
    %177 = vmatprep.subr.mxu0 0.0
    %178 = vmatpush1.msra.mxu0 %v136
    %179 = vmatprep.subr.mxu0 0.0
    %180 = vmatpush1.msra.mxu0 %v135
    %181 = vmatprep.subr.mxu0 0.0
    %182 = vmatpush1.msra.mxu0 %v134
    %183 = vmatprep.subr.mxu0 0.0
    %184 = vmatpush1.msra.mxu0 %v133
    %185 = vmatprep.subr.mxu0 0.0
    %186 = vmatpush1.msra.mxu0 %v132
    %187 = vmatprep.subr.mxu0 0.0
    %188 = vmatpush2.msra.mxu0 0.0
    %189 = vmatprep.subr.mxu0 0.0
    %190 = vmatpush2.msra.mxu0 0.0
    %191 = vmatprep.subr.mxu0 0.0
    %192 = vmatpush2.msra.mxu0 0.0
    %193 = vmatprep.subr.mxu0 0.0
    %194 = vmatpush2.msra.mxu0 0.0
    %195 = vmatprep.subr.mxu0 0.0
    %196 = vmatpush2.msra.mxu0 0.0
    %197 = vmatprep.subr.mxu0 0.0
    %198 = vmatpush2.msra.mxu0 0.0
    %199 = vmatprep.subr.mxu0 0.0
    %200 = vmatpush2.msra.mxu0 0.0
    %201 = vmatprep.subr.mxu0 0.0
    %202 = vmatpush2.msra.mxu0 0.0
    %203 = vmatprep.subr.mxu0 0.0
    %204 = vmatpush2.msra.mxu0 0.0
    %205 = vmatprep.subr.mxu0 0.0
    %206 = vmatpush2.msra.mxu0 0.0
    %207 = vmatprep.subr.mxu0 0.0
    %208 = vmatpush2.msra.mxu0 0.0
    %209 = vmatprep.subr.mxu0 0.0
    %210 = vmatpush2.msra.mxu0 0.0
    %211 = vmatprep.subr.mxu0 0.0
    %212 = vmatpush2.msra.mxu0 0.0
    %213 = vmatprep.subr.mxu0 0.0
    %214 = vmatpush2.msra.mxu0 0.0
    %215 = vmatprep.subr.mxu0 0.0
    %216 = vmatpush2.msra.mxu0 0.0
    %217 = vmatprep.subr.mxu0 0.0
    %218 = vmatpush2.msra.mxu0 0.0
    %219 = vmatprep.mubr.f32.mxu0 0.0
    %220 = vmatmul.mubr.f32.gmra.mxu0 %v131
    %v221 = vpop.f32.mrf.mxu0
    %v222 = vadd.f32 %v153, %v221
    %v223 = vpop.f32.mrf.mxu0
    %224 = vdwg.mxu0
    %v225 = vld [vmem:[#allocation5] sm:$0xff]
    %v226 = vld [vmem:[%s4] sm:$0x3]
    %v228 = vlaneseq
    %v229 = vshrl.u32 %v228, 7
    %v230 = vsub.s32 0, %v229
    %v231 = vrot.slane %v226, %v230
    %v232 = vlaneseq
    %v233 = vshrl.u32 %v232, 7
    %v234 = vsub.s32 1, %v233
    %v235 = vrot.slane %v226, %v234
    %v236 = vcombine.low %v231, %v235
    %v238 = vsub.f32 %v225, %v236
    %v239 = vld [vmem:[%s5] sm:$0x3]
    %v241 = vlaneseq
    %v242 = vshrl.u32 %v241, 7
    %v243 = vsub.s32 0, %v242
    %v244 = vrot.slane %v239, %v243
    %v245 = vlaneseq
    %v246 = vshrl.u32 %v245, 7
    %v247 = vsub.s32 1, %v246
    %v248 = vrot.slane %v239, %v247
    %v249 = vcombine.low %v244, %v248
    %v251 = vmul.f32 %v238, %v249
    %v252 = vld [vmem:[#allocation10] sm:$0xff]
    %v253 = vld [vmem:[#allocation10 + $0x8] sm:$0xff]
    %v254 = vld [vmem:[#allocation10 + $0x10] sm:$0xff]
    %v255 = vld [vmem:[#allocation10 + $0x18] sm:$0xff]
    %v256 = vld [vmem:[#allocation10 + $0x20] sm:$0xff]
    %v257 = vld [vmem:[#allocation10 + $0x28] sm:$0xff]
    %v258 = vld [vmem:[#allocation10 + $0x30] sm:$0xff]
    %v259 = vld [vmem:[#allocation10 + $0x38] sm:$0xff]
    %v260 = vld [vmem:[#allocation10 + $0x40] sm:$0xff]
    %v261 = vld [vmem:[#allocation10 + $0x48] sm:$0xff]
    %v262 = vld [vmem:[#allocation10 + $0x50] sm:$0xff]
    %v263 = vld [vmem:[#allocation10 + $0x58] sm:$0xff]
    %v264 = vld [vmem:[#allocation10 + $0x60] sm:$0xff]
    %v265 = vld [vmem:[#allocation10 + $0x68] sm:$0xff]
    %v266 = vld [vmem:[#allocation10 + $0x70] sm:$0xff]
    %v267 = vld [vmem:[#allocation10 + $0x78] sm:$0xff]
    %v268 = vld [vmem:[#allocation10 + $0x80] sm:$0xff]
    %v269 = vld [vmem:[#allocation10 + $0x88] sm:$0xff]
    %v270 = vld [vmem:[#allocation10 + $0x90] sm:$0xff]
    %v271 = vld [vmem:[#allocation10 + $0x98] sm:$0xff]
    %v272 = vld [vmem:[#allocation10 + $0xa0] sm:$0xff]
    %v273 = vld [vmem:[#allocation10 + $0xa8] sm:$0xff]
    %v274 = vld [vmem:[#allocation10 + $0xb0] sm:$0xff]
    %v275 = vld [vmem:[#allocation10 + $0xb8] sm:$0xff]
    %v276 = vld [vmem:[#allocation10 + $0xc0] sm:$0xff]
    %v277 = vld [vmem:[#allocation10 + $0xc8] sm:$0xff]
    %v278 = vld [vmem:[#allocation10 + $0xd0] sm:$0xff]
    %v279 = vld [vmem:[#allocation10 + $0xd8] sm:$0xff]
    %v280 = vld [vmem:[#allocation10 + $0xe0] sm:$0xff]
    %v281 = vld [vmem:[#allocation10 + $0xe8] sm:$0xff]
    %v282 = vld [vmem:[#allocation10 + $0xf0] sm:$0xff]
    %v283 = vld [vmem:[#allocation10 + $0xf8] sm:$0xff]
    %v284 = vld [vmem:[#allocation10 + $0x100] sm:$0xff]
    %v285 = vld [vmem:[#allocation10 + $0x108] sm:$0xff]
    %v286 = vld [vmem:[#allocation10 + $0x110] sm:$0xff]
    %v287 = vld [vmem:[#allocation10 + $0x118] sm:$0xff]
    %v288 = vld [vmem:[#allocation10 + $0x120] sm:$0xff]
    %v289 = vld [vmem:[#allocation10 + $0x128] sm:$0xff]
    %v290 = vld [vmem:[#allocation10 + $0x130] sm:$0xff]
    %v291 = vld [vmem:[#allocation10 + $0x138] sm:$0xff]
    %v292 = vld [vmem:[#allocation10 + $0x140] sm:$0xff]
    %v293 = vld [vmem:[#allocation10 + $0x148] sm:$0xff]
    %v294 = vld [vmem:[#allocation10 + $0x150] sm:$0xff]
    %v295 = vld [vmem:[#allocation10 + $0x158] sm:$0xff]
    %v296 = vld [vmem:[#allocation10 + $0x160] sm:$0xff]
    %v297 = vld [vmem:[#allocation10 + $0x168] sm:$0xff]
    %v298 = vld [vmem:[#allocation10 + $0x170] sm:$0xff]
    %v299 = vld [vmem:[#allocation10 + $0x178] sm:$0xff]
    %v300 = vld [vmem:[#allocation10 + $0x180] sm:$0xff]
    %v301 = vld [vmem:[#allocation10 + $0x188] sm:$0xff]
    %v302 = vld [vmem:[#allocation10 + $0x190] sm:$0xff]
    %v303 = vld [vmem:[#allocation10 + $0x198] sm:$0xff]
    %v304 = vld [vmem:[#allocation10 + $0x1a0] sm:$0xff]
    %v305 = vld [vmem:[#allocation10 + $0x1a8] sm:$0xff]
    %v306 = vld [vmem:[#allocation10 + $0x1b0] sm:$0xff]
    %v307 = vld [vmem:[#allocation10 + $0x1b8] sm:$0xff]
    %v308 = vld [vmem:[#allocation10 + $0x1c0] sm:$0xff]
    %v309 = vld [vmem:[#allocation10 + $0x1c8] sm:$0xff]
    %v310 = vld [vmem:[#allocation10 + $0x1d0] sm:$0xff]
    %v311 = vld [vmem:[#allocation10 + $0x1d8] sm:$0xff]
    %v312 = vld [vmem:[#allocation10 + $0x1e0] sm:$0xff]
    %v313 = vld [vmem:[#allocation10 + $0x1e8] sm:$0xff]
    %v314 = vld [vmem:[#allocation10 + $0x1f0] sm:$0xff]
    %v315 = vld [vmem:[#allocation10 + $0x1f8] sm:$0xff]
    %v316 = vld [vmem:[%s7] sm:$0x3]
    %v318 = vlaneseq
    %v319 = vshrl.u32 %v318, 7
    %v320 = vsub.s32 0, %v319
    %v321 = vrot.slane %v316, %v320
    %v322 = vlaneseq
    %v323 = vshrl.u32 %v322, 7
    %v324 = vsub.s32 1, %v323
    %v325 = vrot.slane %v316, %v324
    %v329 = vcombine.high %v251, %v251
    %331 = vmatprep.subr.mxu0 %v283
    %332 = vmatpush1.msra.mxu0 %v282
    %333 = vmatprep.subr.mxu0 %v281
    %334 = vmatpush1.msra.mxu0 %v280
    %335 = vmatprep.subr.mxu0 %v279
    %336 = vmatpush1.msra.mxu0 %v278
    %337 = vmatprep.subr.mxu0 %v277
    %338 = vmatpush1.msra.mxu0 %v276
    %339 = vmatprep.subr.mxu0 %v275
    %340 = vmatpush1.msra.mxu0 %v274
    %341 = vmatprep.subr.mxu0 %v273
    %342 = vmatpush1.msra.mxu0 %v272
    %343 = vmatprep.subr.mxu0 %v271
    %344 = vmatpush1.msra.mxu0 %v270
    %345 = vmatprep.subr.mxu0 %v269
    %346 = vmatpush1.msra.mxu0 %v268
    %347 = vmatprep.subr.mxu0 %v267
    %348 = vmatpush1.msra.mxu0 %v266
    %349 = vmatprep.subr.mxu0 %v265
    %350 = vmatpush1.msra.mxu0 %v264
    %351 = vmatprep.subr.mxu0 %v263
    %352 = vmatpush1.msra.mxu0 %v262
    %353 = vmatprep.subr.mxu0 %v261
    %354 = vmatpush1.msra.mxu0 %v260
    %355 = vmatprep.subr.mxu0 %v259
    %356 = vmatpush1.msra.mxu0 %v258
    %357 = vmatprep.subr.mxu0 %v257
    %358 = vmatpush1.msra.mxu0 %v256
    %359 = vmatprep.subr.mxu0 %v255
    %360 = vmatpush1.msra.mxu0 %v254
    %361 = vmatprep.subr.mxu0 %v253
    %362 = vmatpush1.msra.mxu0 %v252
    %363 = vmatprep.subr.mxu0 %v315
    %364 = vmatpush2.msra.mxu0 %v314
    %365 = vmatprep.subr.mxu0 %v313
    %366 = vmatpush2.msra.mxu0 %v312
    %367 = vmatprep.subr.mxu0 %v311
    %368 = vmatpush2.msra.mxu0 %v310
    %369 = vmatprep.subr.mxu0 %v309
    %370 = vmatpush2.msra.mxu0 %v308
    %371 = vmatprep.subr.mxu0 %v307
    %372 = vmatpush2.msra.mxu0 %v306
    %373 = vmatprep.subr.mxu0 %v305
    %374 = vmatpush2.msra.mxu0 %v304
    %375 = vmatprep.subr.mxu0 %v303
    %376 = vmatpush2.msra.mxu0 %v302
    %377 = vmatprep.subr.mxu0 %v301
    %378 = vmatpush2.msra.mxu0 %v300
    %379 = vmatprep.subr.mxu0 %v299
    %380 = vmatpush2.msra.mxu0 %v298
    %381 = vmatprep.subr.mxu0 %v297
    %382 = vmatpush2.msra.mxu0 %v296
    %383 = vmatprep.subr.mxu0 %v295
    %384 = vmatpush2.msra.mxu0 %v294
    %385 = vmatprep.subr.mxu0 %v293
    %386 = vmatpush2.msra.mxu0 %v292
    %387 = vmatprep.subr.mxu0 %v291
    %388 = vmatpush2.msra.mxu0 %v290
    %389 = vmatprep.subr.mxu0 %v289
    %390 = vmatpush2.msra.mxu0 %v288
    %391 = vmatprep.subr.mxu0 %v287
    %392 = vmatpush2.msra.mxu0 %v286
    %393 = vmatprep.subr.mxu0 %v285
    %394 = vmatpush2.msra.mxu0 %v284
    %395 = vmatprep.mubr.f32.mxu0 %v329
    %396 = vmatmul.mubr.f32.gmra.mxu0 %v251
    %v397 = vpop.f32.mrf.mxu0
    %v398 = vadd.f32 %v321, %v397
    %v399 = vpop.f32.mrf.mxu0
    %v400 = vadd.f32 %v325, %v399
    %401 = vdwg.mxu0
    %v402 = vmul.f32 %v398, 0.5
    %v403 = vmul.f32 %v400, 0.5
    %v404 = vmul.f32 %v398, 0.70710677
    %v405 = vmul.f32 %v400, 0.70710677
    %v406 = vand.u32 2147483647, %v404
    %v407 = vand.u32 2147483647, %v405
    %v408 = vmul.f32 %v406, 0.3275911
    %v409 = vmul.f32 %v407, 0.3275911
    %v410 = vadd.f32 %v408, 1.0
    %v411 = vadd.f32 %v409, 1.0
    %v412 = vrcp.pop %v410
    %v413 = vmul.f32 1.0, %v412
    %v414 = vrcp.pop %v411
    %v415 = vmul.f32 1.0, %v414
    %v416 = vmul.f32 %v413, 1.0614054
    %v417 = vmul.f32 %v415, 1.0614054
    %v418 = vadd.f32 %v416, -1.4531521
    %v419 = vadd.f32 %v417, -1.4531521
    %v420 = vmul.f32 %v418, %v413
    %v421 = vmul.f32 %v419, %v415
    %v422 = vadd.f32 %v420, 1.4214138
    %v423 = vadd.f32 %v421, 1.4214138
    %v424 = vmul.f32 %v422, %v413
    %v425 = vmul.f32 %v423, %v415
    %v426 = vadd.f32 %v424, -0.28449672
    %v427 = vadd.f32 %v425, -0.28449672
    %v428 = vmul.f32 %v426, %v413
    %v429 = vmul.f32 %v427, %v415
    %v430 = vadd.f32 %v428, 0.2548296
    %v431 = vadd.f32 %v429, 0.2548296
    %v432 = vmul.f32 %v430, %v413
    %v433 = vmul.f32 %v431, %v415
    %v434 = vsub.f32 0.0, %v406
    %v435 = vsub.f32 0.0, %v407
    %v436 = vmul.f32 %v434, %v406
    %v437 = vmul.f32 %v435, %v407
    %v438 = vmul.f32 %v436, 1.442695
    %v439 = vpow.pop %v438
    %v440 = vmul.f32 %v437, 1.442695
    %v441 = vpow.pop %v440
    %v442 = vmul.f32 %v432, %v439
    %v443 = vmul.f32 %v433, %v441
    %v444 = vsub.f32 1.0, %v442
    %v445 = vsub.f32 1.0, %v443
    %vm446 = vcmp.ge.f32.partialorder %v404, 0.0
    %vm447 = vcmp.ge.f32.partialorder %v405, 0.0
    %v448 = vsub.f32 0.0, %v444
    %v449 = vsub.f32 0.0, %v445
    %v450 = vsel %vm446, %v444, %v448
    %v451 = vsel %vm447, %v445, %v449
    %v452 = vadd.f32 %v450, 1.0
    %v453 = vadd.f32 %v451, 1.0
    %v454 = vmul.f32 %v402, %v452
    %v455 = vmul.f32 %v403, %v453
    %v456 = vld [vmem:[#allocation11] sm:$0xff]
    %v457 = vld [vmem:[#allocation11 + $0x8] sm:$0xff]
    %v458 = vld [vmem:[#allocation11 + $0x10] sm:$0xff]
    %v459 = vld [vmem:[#allocation11 + $0x18] sm:$0xff]
    %v460 = vld [vmem:[#allocation11 + $0x20] sm:$0xff]
    %v461 = vld [vmem:[#allocation11 + $0x28] sm:$0xff]
    %v462 = vld [vmem:[#allocation11 + $0x30] sm:$0xff]
    %v463 = vld [vmem:[#allocation11 + $0x38] sm:$0xff]
    %v464 = vld [vmem:[#allocation11 + $0x40] sm:$0xff]
    %v465 = vld [vmem:[#allocation11 + $0x48] sm:$0xff]
    %v466 = vld [vmem:[#allocation11 + $0x50] sm:$0xff]
    %v467 = vld [vmem:[#allocation11 + $0x58] sm:$0xff]
    %v468 = vld [vmem:[#allocation11 + $0x60] sm:$0xff]
    %v469 = vld [vmem:[#allocation11 + $0x68] sm:$0xff]
    %v470 = vld [vmem:[#allocation11 + $0x70] sm:$0xff]
    %v471 = vld [vmem:[#allocation11 + $0x78] sm:$0xff]
    %v472 = vld [vmem:[#allocation11 + $0x80] sm:$0xff]
    %v473 = vld [vmem:[#allocation11 + $0x88] sm:$0xff]
    %v474 = vld [vmem:[#allocation11 + $0x90] sm:$0xff]
    %v475 = vld [vmem:[#allocation11 + $0x98] sm:$0xff]
    %v476 = vld [vmem:[#allocation11 + $0xa0] sm:$0xff]
    %v477 = vld [vmem:[#allocation11 + $0xa8] sm:$0xff]
    %v478 = vld [vmem:[#allocation11 + $0xb0] sm:$0xff]
    %v479 = vld [vmem:[#allocation11 + $0xb8] sm:$0xff]
    %v480 = vld [vmem:[#allocation11 + $0xc0] sm:$0xff]
    %v481 = vld [vmem:[#allocation11 + $0xc8] sm:$0xff]
    %v482 = vld [vmem:[#allocation11 + $0xd0] sm:$0xff]
    %v483 = vld [vmem:[#allocation11 + $0xd8] sm:$0xff]
    %v484 = vld [vmem:[#allocation11 + $0xe0] sm:$0xff]
    %v485 = vld [vmem:[#allocation11 + $0xe8] sm:$0xff]
    %v486 = vld [vmem:[#allocation11 + $0xf0] sm:$0xff]
    %v487 = vld [vmem:[#allocation11 + $0xf8] sm:$0xff]
    %v488 = vld [vmem:[#allocation11 + $0x100] sm:$0xff]
    %v489 = vld [vmem:[#allocation11 + $0x108] sm:$0xff]
    %v490 = vld [vmem:[#allocation11 + $0x110] sm:$0xff]
    %v491 = vld [vmem:[#allocation11 + $0x118] sm:$0xff]
    %v492 = vld [vmem:[#allocation11 + $0x120] sm:$0xff]
    %v493 = vld [vmem:[#allocation11 + $0x128] sm:$0xff]
    %v494 = vld [vmem:[#allocation11 + $0x130] sm:$0xff]
    %v495 = vld [vmem:[#allocation11 + $0x138] sm:$0xff]
    %v496 = vld [vmem:[#allocation11 + $0x140] sm:$0xff]
    %v497 = vld [vmem:[#allocation11 + $0x148] sm:$0xff]
    %v498 = vld [vmem:[#allocation11 + $0x150] sm:$0xff]
    %v499 = vld [vmem:[#allocation11 + $0x158] sm:$0xff]
    %v500 = vld [vmem:[#allocation11 + $0x160] sm:$0xff]
    %v501 = vld [vmem:[#allocation11 + $0x168] sm:$0xff]
    %v502 = vld [vmem:[#allocation11 + $0x170] sm:$0xff]
    %v503 = vld [vmem:[#allocation11 + $0x178] sm:$0xff]
    %v504 = vld [vmem:[#allocation11 + $0x180] sm:$0xff]
    %v505 = vld [vmem:[#allocation11 + $0x188] sm:$0xff]
    %v506 = vld [vmem:[#allocation11 + $0x190] sm:$0xff]
    %v507 = vld [vmem:[#allocation11 + $0x198] sm:$0xff]
    %v508 = vld [vmem:[#allocation11 + $0x1a0] sm:$0xff]
    %v509 = vld [vmem:[#allocation11 + $0x1a8] sm:$0xff]
    %v510 = vld [vmem:[#allocation11 + $0x1b0] sm:$0xff]
    %v511 = vld [vmem:[#allocation11 + $0x1b8] sm:$0xff]
    %v512 = vld [vmem:[#allocation11 + $0x1c0] sm:$0xff]
    %v513 = vld [vmem:[#allocation11 + $0x1c8] sm:$0xff]
    %v514 = vld [vmem:[#allocation11 + $0x1d0] sm:$0xff]
    %v515 = vld [vmem:[#allocation11 + $0x1d8] sm:$0xff]
    %v516 = vld [vmem:[#allocation11 + $0x1e0] sm:$0xff]
    %v517 = vld [vmem:[#allocation11 + $0x1e8] sm:$0xff]
    %v518 = vld [vmem:[#allocation11 + $0x1f0] sm:$0xff]
    %v519 = vld [vmem:[#allocation11 + $0x1f8] sm:$0xff]
    %v520 = vld [vmem:[%s9] sm:$0x3]
    %v522 = vlaneseq
    %v523 = vshrl.u32 %v522, 7
    %v524 = vsub.s32 0, %v523
    %v525 = vrot.slane %v520, %v524
    %v526 = vlaneseq
    %v527 = vshrl.u32 %v526, 7
    %v528 = vsub.s32 1, %v527
    %v529 = vrot.slane %v520, %v528
    %532 = vmatprep.subr.mxu0 %v487
    %533 = vmatpush1.msra.mxu0 %v486
    %534 = vmatprep.subr.mxu0 %v485
    %535 = vmatpush1.msra.mxu0 %v484
    %536 = vmatprep.subr.mxu0 %v483
    %537 = vmatpush1.msra.mxu0 %v482
    %538 = vmatprep.subr.mxu0 %v481
    %539 = vmatpush1.msra.mxu0 %v480
    %540 = vmatprep.subr.mxu0 %v479
    %541 = vmatpush1.msra.mxu0 %v478
    %542 = vmatprep.subr.mxu0 %v477
    %543 = vmatpush1.msra.mxu0 %v476
    %544 = vmatprep.subr.mxu0 %v475
    %545 = vmatpush1.msra.mxu0 %v474
    %546 = vmatprep.subr.mxu0 %v473
    %547 = vmatpush1.msra.mxu0 %v472
    %548 = vmatprep.subr.mxu0 %v471
    %549 = vmatpush1.msra.mxu0 %v470
    %550 = vmatprep.subr.mxu0 %v469
    %551 = vmatpush1.msra.mxu0 %v468
    %552 = vmatprep.subr.mxu0 %v467
    %553 = vmatpush1.msra.mxu0 %v466
    %554 = vmatprep.subr.mxu0 %v465
    %555 = vmatpush1.msra.mxu0 %v464
    %556 = vmatprep.subr.mxu0 %v463
    %557 = vmatpush1.msra.mxu0 %v462
    %558 = vmatprep.subr.mxu0 %v461
    %559 = vmatpush1.msra.mxu0 %v460
    %560 = vmatprep.subr.mxu0 %v459
    %561 = vmatpush1.msra.mxu0 %v458
    %562 = vmatprep.subr.mxu0 %v457
    %563 = vmatpush1.msra.mxu0 %v456
    %564 = vmatprep.subr.mxu0 %v519
    %565 = vmatpush2.msra.mxu0 %v518
    %566 = vmatprep.subr.mxu0 %v517
    %567 = vmatpush2.msra.mxu0 %v516
    %568 = vmatprep.subr.mxu0 %v515
    %569 = vmatpush2.msra.mxu0 %v514
    %570 = vmatprep.subr.mxu0 %v513
    %571 = vmatpush2.msra.mxu0 %v512
    %572 = vmatprep.subr.mxu0 %v511
    %573 = vmatpush2.msra.mxu0 %v510
    %574 = vmatprep.subr.mxu0 %v509
    %575 = vmatpush2.msra.mxu0 %v508
    %576 = vmatprep.subr.mxu0 %v507
    %577 = vmatpush2.msra.mxu0 %v506
    %578 = vmatprep.subr.mxu0 %v505
    %579 = vmatpush2.msra.mxu0 %v504
    %580 = vmatprep.subr.mxu0 %v503
    %581 = vmatpush2.msra.mxu0 %v502
    %582 = vmatprep.subr.mxu0 %v501
    %583 = vmatpush2.msra.mxu0 %v500
    %584 = vmatprep.subr.mxu0 %v499
    %585 = vmatpush2.msra.mxu0 %v498
    %586 = vmatprep.subr.mxu0 %v497
    %587 = vmatpush2.msra.mxu0 %v496
    %588 = vmatprep.subr.mxu0 %v495
    %589 = vmatpush2.msra.mxu0 %v494
    %590 = vmatprep.subr.mxu0 %v493
    %591 = vmatpush2.msra.mxu0 %v492
    %592 = vmatprep.subr.mxu0 %v491
    %593 = vmatpush2.msra.mxu0 %v490
    %594 = vmatprep.subr.mxu0 %v489
    %595 = vmatpush2.msra.mxu0 %v488
    %596 = vmatprep.mubr.f32.mxu0 %v455
    %597 = vmatmul.mubr.f32.gmra.mxu0 %v454
    %v598 = vpop.f32.mrf.mxu0
    %v599 = vadd.f32 %v525, %v598
    %v600 = vpop.f32.mrf.mxu0
    %v601 = vadd.f32 %v529, %v600
    %602 = vdwg.mxu0
    %v603 = vmul.f32 %v599, 0.5
    %v604 = vmul.f32 %v601, 0.5
    %v605 = vmul.f32 %v599, 0.70710677
    %v606 = vmul.f32 %v601, 0.70710677
    %v607 = vand.u32 2147483647, %v605
    %v608 = vand.u32 2147483647, %v606
    %v609 = vmul.f32 %v607, 0.3275911
    %v610 = vmul.f32 %v608, 0.3275911
    %v611 = vadd.f32 %v609, 1.0
    %v612 = vadd.f32 %v610, 1.0
    %v613 = vrcp.pop %v611
    %v614 = vmul.f32 1.0, %v613
    %v615 = vrcp.pop %v612
    %v616 = vmul.f32 1.0, %v615
    %v617 = vmul.f32 %v614, 1.0614054
    %v618 = vmul.f32 %v616, 1.0614054
    %v619 = vadd.f32 %v617, -1.4531521
    %v620 = vadd.f32 %v618, -1.4531521
    %v621 = vmul.f32 %v619, %v614
    %v622 = vmul.f32 %v620, %v616
    %v623 = vadd.f32 %v621, 1.4214138
    %v624 = vadd.f32 %v622, 1.4214138
    %v625 = vmul.f32 %v623, %v614
    %v626 = vmul.f32 %v624, %v616
    %v627 = vadd.f32 %v625, -0.28449672
    %v628 = vadd.f32 %v626, -0.28449672
    %v629 = vmul.f32 %v627, %v614
    %v630 = vmul.f32 %v628, %v616
    %v631 = vadd.f32 %v629, 0.2548296
    %v632 = vadd.f32 %v630, 0.2548296
    %v633 = vmul.f32 %v631, %v614
    %v634 = vmul.f32 %v632, %v616
    %v635 = vsub.f32 0.0, %v607
    %v636 = vsub.f32 0.0, %v608
    %v637 = vmul.f32 %v635, %v607
    %v638 = vmul.f32 %v636, %v608
    %v639 = vmul.f32 %v637, 1.442695
    %v640 = vpow.pop %v639
    %v641 = vmul.f32 %v638, 1.442695
    %v642 = vpow.pop %v641
    %v643 = vmul.f32 %v633, %v640
    %v644 = vmul.f32 %v634, %v642
    %v645 = vsub.f32 1.0, %v643
    %v646 = vsub.f32 1.0, %v644
    %vm647 = vcmp.ge.f32.partialorder %v605, 0.0
    %vm648 = vcmp.ge.f32.partialorder %v606, 0.0
    %v649 = vsub.f32 0.0, %v645
    %v650 = vsub.f32 0.0, %v646
    %v651 = vsel %vm647, %v645, %v649
    %v652 = vsel %vm648, %v646, %v650
    %v653 = vadd.f32 %v651, 1.0
    %v654 = vadd.f32 %v652, 1.0
    %v655 = vmul.f32 %v603, %v653
    %v656 = vmul.f32 %v604, %v654
    %v657 = vld [vmem:[#allocation13] sm:$0xff]
    %v658 = vld [vmem:[#allocation13 + $0x8] sm:$0xff]
    %v659 = vld [vmem:[#allocation13 + $0x10] sm:$0xff]
    %v660 = vld [vmem:[#allocation13 + $0x18] sm:$0xff]
    %v661 = vld [vmem:[#allocation13 + $0x20] sm:$0xff]
    %v662 = vld [vmem:[#allocation13 + $0x28] sm:$0xff]
    %v663 = vld [vmem:[#allocation13 + $0x30] sm:$0xff]
    %v664 = vld [vmem:[#allocation13 + $0x38] sm:$0xff]
    %v665 = vld [vmem:[#allocation13 + $0x40] sm:$0xff]
    %v666 = vld [vmem:[#allocation13 + $0x48] sm:$0xff]
    %v667 = vld [vmem:[#allocation13 + $0x50] sm:$0xff]
    %v668 = vld [vmem:[#allocation13 + $0x58] sm:$0xff]
    %v669 = vld [vmem:[#allocation13 + $0x60] sm:$0xff]
    %v670 = vld [vmem:[#allocation13 + $0x68] sm:$0xff]
    %v671 = vld [vmem:[#allocation13 + $0x70] sm:$0xff]
    %v672 = vld [vmem:[#allocation13 + $0x78] sm:$0xff]
    %v673 = vld [vmem:[#allocation13 + $0x80] sm:$0xff]
    %v674 = vld [vmem:[#allocation13 + $0x88] sm:$0xff]
    %v675 = vld [vmem:[#allocation13 + $0x90] sm:$0xff]
    %v676 = vld [vmem:[#allocation13 + $0x98] sm:$0xff]
    %v677 = vld [vmem:[#allocation13 + $0xa0] sm:$0xff]
    %v678 = vld [vmem:[#allocation13 + $0xa8] sm:$0xff]
    %v679 = vld [vmem:[#allocation13 + $0xb0] sm:$0xff]
    %v680 = vld [vmem:[#allocation13 + $0xb8] sm:$0xff]
    %v681 = vld [vmem:[#allocation13 + $0xc0] sm:$0xff]
    %v682 = vld [vmem:[#allocation13 + $0xc8] sm:$0xff]
    %v683 = vld [vmem:[#allocation13 + $0xd0] sm:$0xff]
    %v684 = vld [vmem:[#allocation13 + $0xd8] sm:$0xff]
    %v685 = vld [vmem:[#allocation13 + $0xe0] sm:$0xff]
    %v686 = vld [vmem:[#allocation13 + $0xe8] sm:$0xff]
    %v687 = vld [vmem:[#allocation13 + $0xf0] sm:$0xff]
    %v688 = vld [vmem:[#allocation13 + $0xf8] sm:$0xff]
    %v689 = vld [vmem:[#allocation13 + $0x100] sm:$0xff]
    %v690 = vld [vmem:[#allocation13 + $0x108] sm:$0xff]
    %v691 = vld [vmem:[#allocation13 + $0x110] sm:$0xff]
    %v692 = vld [vmem:[#allocation13 + $0x118] sm:$0xff]
    %v693 = vld [vmem:[#allocation13 + $0x120] sm:$0xff]
    %v694 = vld [vmem:[#allocation13 + $0x128] sm:$0xff]
    %v695 = vld [vmem:[#allocation13 + $0x130] sm:$0xff]
    %v696 = vld [vmem:[#allocation13 + $0x138] sm:$0xff]
    %v697 = vld [vmem:[#allocation13 + $0x140] sm:$0xff]
    %v698 = vld [vmem:[#allocation13 + $0x148] sm:$0xff]
    %v699 = vld [vmem:[#allocation13 + $0x150] sm:$0xff]
    %v700 = vld [vmem:[#allocation13 + $0x158] sm:$0xff]
    %v701 = vld [vmem:[#allocation13 + $0x160] sm:$0xff]
    %v702 = vld [vmem:[#allocation13 + $0x168] sm:$0xff]
    %v703 = vld [vmem:[#allocation13 + $0x170] sm:$0xff]
    %v704 = vld [vmem:[#allocation13 + $0x178] sm:$0xff]
    %v705 = vld [vmem:[#allocation13 + $0x180] sm:$0xff]
    %v706 = vld [vmem:[#allocation13 + $0x188] sm:$0xff]
    %v707 = vld [vmem:[#allocation13 + $0x190] sm:$0xff]
    %v708 = vld [vmem:[#allocation13 + $0x198] sm:$0xff]
    %v709 = vld [vmem:[#allocation13 + $0x1a0] sm:$0xff]
    %v710 = vld [vmem:[#allocation13 + $0x1a8] sm:$0xff]
    %v711 = vld [vmem:[#allocation13 + $0x1b0] sm:$0xff]
    %v712 = vld [vmem:[#allocation13 + $0x1b8] sm:$0xff]
    %v713 = vld [vmem:[#allocation13 + $0x1c0] sm:$0xff]
    %v714 = vld [vmem:[#allocation13 + $0x1c8] sm:$0xff]
    %v715 = vld [vmem:[#allocation13 + $0x1d0] sm:$0xff]
    %v716 = vld [vmem:[#allocation13 + $0x1d8] sm:$0xff]
    %v717 = vld [vmem:[#allocation13 + $0x1e0] sm:$0xff]
    %v718 = vld [vmem:[#allocation13 + $0x1e8] sm:$0xff]
    %v719 = vld [vmem:[#allocation13 + $0x1f0] sm:$0xff]
    %v720 = vld [vmem:[#allocation13 + $0x1f8] sm:$0xff]
    %v721 = vld [vmem:[%s11] sm:$0x3]
    %v723 = vlaneseq
    %v724 = vshrl.u32 %v723, 7
    %v725 = vsub.s32 0, %v724
    %v726 = vrot.slane %v721, %v725
    %v727 = vlaneseq
    %v728 = vshrl.u32 %v727, 7
    %v729 = vsub.s32 1, %v728
    %v730 = vrot.slane %v721, %v729
    %733 = vmatprep.subr.mxu0 %v688
    %734 = vmatpush1.msra.mxu0 %v687
    %735 = vmatprep.subr.mxu0 %v686
    %736 = vmatpush1.msra.mxu0 %v685
    %737 = vmatprep.subr.mxu0 %v684
    %738 = vmatpush1.msra.mxu0 %v683
    %739 = vmatprep.subr.mxu0 %v682
    %740 = vmatpush1.msra.mxu0 %v681
    %741 = vmatprep.subr.mxu0 %v680
    %742 = vmatpush1.msra.mxu0 %v679
    %743 = vmatprep.subr.mxu0 %v678
    %744 = vmatpush1.msra.mxu0 %v677
    %745 = vmatprep.subr.mxu0 %v676
    %746 = vmatpush1.msra.mxu0 %v675
    %747 = vmatprep.subr.mxu0 %v674
    %748 = vmatpush1.msra.mxu0 %v673
    %749 = vmatprep.subr.mxu0 %v672
    %750 = vmatpush1.msra.mxu0 %v671
    %751 = vmatprep.subr.mxu0 %v670
    %752 = vmatpush1.msra.mxu0 %v669
    %753 = vmatprep.subr.mxu0 %v668
    %754 = vmatpush1.msra.mxu0 %v667
    %755 = vmatprep.subr.mxu0 %v666
    %756 = vmatpush1.msra.mxu0 %v665
    %757 = vmatprep.subr.mxu0 %v664
    %758 = vmatpush1.msra.mxu0 %v663
    %759 = vmatprep.subr.mxu0 %v662
    %760 = vmatpush1.msra.mxu0 %v661
    %761 = vmatprep.subr.mxu0 %v660
    %762 = vmatpush1.msra.mxu0 %v659
    %763 = vmatprep.subr.mxu0 %v658
    %764 = vmatpush1.msra.mxu0 %v657
    %765 = vmatprep.subr.mxu0 %v720
    %766 = vmatpush2.msra.mxu0 %v719
    %767 = vmatprep.subr.mxu0 %v718
    %768 = vmatpush2.msra.mxu0 %v717
    %769 = vmatprep.subr.mxu0 %v716
    %770 = vmatpush2.msra.mxu0 %v715
    %771 = vmatprep.subr.mxu0 %v714
    %772 = vmatpush2.msra.mxu0 %v713
    %773 = vmatprep.subr.mxu0 %v712
    %774 = vmatpush2.msra.mxu0 %v711
    %775 = vmatprep.subr.mxu0 %v710
    %776 = vmatpush2.msra.mxu0 %v709
    %777 = vmatprep.subr.mxu0 %v708
    %778 = vmatpush2.msra.mxu0 %v707
    %779 = vmatprep.subr.mxu0 %v706
    %780 = vmatpush2.msra.mxu0 %v705
    %781 = vmatprep.subr.mxu0 %v704
    %782 = vmatpush2.msra.mxu0 %v703
    %783 = vmatprep.subr.mxu0 %v702
    %784 = vmatpush2.msra.mxu0 %v701
    %785 = vmatprep.subr.mxu0 %v700
    %786 = vmatpush2.msra.mxu0 %v699
    %787 = vmatprep.subr.mxu0 %v698
    %788 = vmatpush2.msra.mxu0 %v697
    %789 = vmatprep.subr.mxu0 %v696
    %790 = vmatpush2.msra.mxu0 %v695
    %791 = vmatprep.subr.mxu0 %v694
    %792 = vmatpush2.msra.mxu0 %v693
    %793 = vmatprep.subr.mxu0 %v692
    %794 = vmatpush2.msra.mxu0 %v691
    %795 = vmatprep.subr.mxu0 %v690
    %796 = vmatpush2.msra.mxu0 %v689
    %797 = vmatprep.mubr.f32.mxu0 %v656
    %798 = vmatmul.mubr.f32.gmra.mxu0 %v655
    %v799 = vpop.f32.mrf.mxu0
    %v800 = vadd.f32 %v726, %v799
    %v801 = vpop.f32.mrf.mxu0
    %v802 = vadd.f32 %v730, %v801
    %803 = vdwg.mxu0
    %804 = vst [vmem:[#allocation14] sm:$0xf] %v222
    %v807 = vcombine.low %v800, %v802
    %809 = vst [vmem:[#allocation14 + $0x4] sm:$0xff] %v807
    // Predicated region
    $region78: #{tpu_custom_call.1} parent=1 // pred_check
      _
    $region79: #{tpu_custom_call.1} parent=1 // pred_check_branch
      %811 = sbr.rel (0) target = $region81
    $region80: #{tpu_custom_call.1} parent=1 // pred_region
      %s813 = ssub.s32 192, 192
      %814 = vsyncadd [#allocation4], %s813
      %s816 = sshll.u32 [#allocation14], 4
      %s817 = int_to_ptr.vmem [resolvable:$true] %s816
      %819 = dma.vmem_to_hbm [thread:$0]  %s817, 192, %s12, [#allocation4]
    $region81: #{tpu_custom_call.1} parent=1 // pred_fallthru
      _
    // Predicated region
    $region82: #{tpu_custom_call.1} parent=1 // pred_check
      _
    $region83: #{tpu_custom_call.1} parent=1 // pred_check_branch
      %821 = sbr.rel (0) target = $region85
    $region84: #{tpu_custom_call.1} parent=1 // pred_region
      %822 = dma.done [#allocation4], 192
    $region85: #{tpu_custom_call.1} parent=1 // pred_fallthru
      _
    %823 = vsyncpa [#allocation3], 1
    %824 = vsyncpa [#allocation6], 1
    %825 = vsyncpa [#allocation9], 1
    %826 = vsyncpa [#allocation12], 1
    %827 = vsyncpa [#allocation4], 1

</llo_original>
